<compile_context>
chip_gen: v7x
topology: tpu7x:2x2x1
jax: 0.10.0
libtpu: 0.0.40
codegen_flags: <defaults>
</compile_context>

<pallas_src>
import functools

import jax
import jax.numpy as jnp
from jax import lax
from jax.experimental import pallas as pl
from jax.experimental.pallas import tpu as pltpu

EPS = 1e-5


# --------------------------------------------------------------------------------------
# Pallas kernels
# --------------------------------------------------------------------------------------
def _make_axial_kernels(C, L, groups):
    """Build the two per-block kernels, closing over the static sizes."""
    gp = C // groups          # group_planes
    gph = gp // 2             # half group planes (q / k width)

    def _qkv_tile(x_ref, w_ref, bias_ref):
        # x_ref block: (1, C, L);  w_ref: (2C, C) with bn_qkv scale folded in;  bias_ref: (2C, 1)
        x = x_ref[0]
        return jnp.dot(w_ref[...], x, preferred_element_type=jnp.float32) + bias_ref[...]

    def _group_slices(qkv, g):
        base = g * 2 * gp
        qg = qkv[base:base + gph]                    # (gph, L)
        kg = qkv[base + gph:base + 2 * gph]          # (gph, L)
        vg = qkv[base + 2 * gph:base + 2 * gp]       # (gp, L)
        return qg, kg, vg

    def _qk(qg, kg):
        # qk[i, j] = sum_c q[c, i] * k[c, j]  (tiny contraction -> VPU outer-product sum)
        return jnp.sum(qg[:, :, None] * kg[:, None, :], axis=0)

    def _pos(ag, emb):
        # out[i, j] = sum_c a[c, i] * emb[c, i, j]
        return jnp.sum(ag[:, :, None] * emb, axis=0)

    # ---------------- pass 1: accumulate bn_similarity statistics over the batch ----------
    def sim_stats_kernel(x_ref, w_ref, bias_ref, qe_ref, ke_ref, stats_ref):
        i = pl.program_id(0)

        @pl.when(i == 0)
        def _init():
            stats_ref[...] = jnp.zeros_like(stats_ref)

        qkv = _qkv_tile(x_ref, w_ref, bias_ref)      # (2C, L), bn_qkv already applied

        qk_s, qr_s, kr_s = [], [], []
        qk_q, qr_q, kr_q = [], [], []
        for g in range(groups):
            qg, kg, _ = _group_slices(qkv, g)
            qk = _qk(qg, kg)                         # (L, L)
            qr = _pos(qg, qe_ref[...])               # (L, L)
            krp = _pos(kg, ke_ref[...])              # (L, L)  (transpose does not change stats)
            qk_s.append(jnp.sum(qk, axis=0, keepdims=True))
            qr_s.append(jnp.sum(qr, axis=0, keepdims=True))
            kr_s.append(jnp.sum(krp, axis=0, keepdims=True))
            qk_q.append(jnp.sum(qk * qk, axis=0, keepdims=True))
            qr_q.append(jnp.sum(qr * qr, axis=0, keepdims=True))
            kr_q.append(jnp.sum(krp * krp, axis=0, keepdims=True))

        # rows 0..3G-1 : per-channel partial sums, rows 3G..6G-1 : partial sums of squares
        contrib = jnp.concatenate(qk_s + qr_s + kr_s + qk_q + qr_q + kr_q, axis=0)  # (6G, L)
        stats_ref[...] += contrib

    # ---------------- pass 2: attention with precomputed bn_similarity scale/shift --------
    def attn_kernel(x_ref, w_ref, bias_ref, qe_ref, ke_ref, ve_ref, prm_ref,
                    sv_ref, sve_ref):
        qkv = _qkv_tile(x_ref, w_ref, bias_ref)      # (2C, L)

        sv_parts, sve_parts = [], []
        for g in range(groups):
            qg, kg, vg = _group_slices(qkv, g)
            qk = _qk(qg, kg)                         # (L, L)
            qr = _pos(qg, qe_ref[...])               # (L, L)
            kr = _pos(kg, ke_ref[...]).T             # (L, L)

            # bn_similarity (scale/shift per channel, read as scalars from SMEM) + group sum
            sim = (qk * prm_ref[0, g]
                   + qr * prm_ref[0, groups + g]
                   + kr * prm_ref[0, 2 * groups + g]
                   + (prm_ref[1, g] + prm_ref[1, groups + g] + prm_ref[1, 2 * groups + g]))

            # softmax over the last axis
            m = jnp.max(sim, axis=-1, keepdims=True)
            p = jnp.exp(sim - m)
            sm = p / jnp.sum(p, axis=-1, keepdims=True)

            # sv[c, i] = sum_j sm[i, j] * v[c, j]   (NT matmul on the MXU)
            sv_g = lax.dot_general(vg, sm, (((1,), (1,)), ((), ())),
                                   preferred_element_type=jnp.float32)          # (gp, L)
            # sve[c, i] = sum_j sm[i, j] * v_emb[c, i, j]
            sve_g = jnp.sum(ve_ref[...] * sm[None, :, :], axis=-1)               # (gp, L)

            sv_parts.append(sv_g)
            sve_parts.append(sve_g)

        sv_ref[0] = jnp.concatenate(sv_parts, axis=0)
        sve_ref[0] = jnp.concatenate(sve_parts, axis=0)

    return sim_stats_kernel, attn_kernel


def _residual_relu_kernel(a_ref, x_ref, o_ref):
    o_ref[...] = jnp.maximum(a_ref[...] + x_ref[...], 0.0)


# --------------------------------------------------------------------------------------
# One AxialAttention block (forward, training-mode BN), Pallas-backed
# --------------------------------------------------------------------------------------
def _axial_attention_forward(x, p, *, groups, width):
    N, C, H, W = x.shape
    if width:
        xb = jnp.transpose(x, (0, 2, 1, 3)).reshape(N * H, C, W)   # (B, C, L), attend over W
        L = W
    else:
        xb = jnp.transpose(x, (0, 3, 1, 2)).reshape(N * W, C, H)   # (B, C, L), attend over H
        L = H
    B = xb.shape[0]
    gp = C // groups
    gph = gp // 2
    C2 = 2 * C
    G3 = 3 * groups

    # ---- bn_qkv (training-mode) folded analytically into the qkv weight (Gram trick) ----
    w_qkv = p['w_qkv']                                              # (2C, C)
    mean_x = jnp.mean(xb, axis=(0, 2))                              # (C,)
    second_x = jnp.einsum('bcl,bdl->cd', xb, xb) / (B * L)          # (C, C)
    mean_qkv = w_qkv @ mean_x                                       # (2C,)
    ex2_qkv = jnp.einsum('oc,cd,od->o', w_qkv, second_x, w_qkv)     # (2C,)
    var_qkv = jnp.maximum(ex2_qkv - mean_qkv ** 2, 0.0)
    scale_qkv = p['bn_qkv_gamma'] * lax.rsqrt(var_qkv + EPS)
    shift_qkv = p['bn_qkv_beta'] - mean_qkv * scale_qkv
    w_eff = (scale_qkv[:, None] * w_qkv).astype(jnp.float32)        # (2C, C)
    b_eff = shift_qkv[:, None].astype(jnp.float32)                  # (2C, 1)

    # ---- relative position embeddings ----
    qi = jnp.arange(L)[None, :]
    ki = jnp.arange(L)[:, None]
    rel_idx = (ki - qi + L - 1).reshape(-1)
    all_emb = jnp.take(p['relative'], rel_idx, axis=1).reshape(2 * gp, L, L)
    q_emb = all_emb[:gph]
    k_emb = all_emb[gph:2 * gph]
    v_emb = all_emb[2 * gph:]

    sim_stats_kernel, attn_kernel = _make_axial_kernels(C, L, groups)
    const2 = lambda i: (0, 0)
    const3 = lambda i: (0, 0, 0)

    # ---- pass 1: bn_similarity statistics (grid over B, accumulator output) ----
    stats = pl.pallas_call(
        sim_stats_kernel,
        grid=(B,),
        in_specs=[pl.BlockSpec((1, C, L), lambda i: (i, 0, 0)),
                  pl.BlockSpec((C2, C), const2),
                  pl.BlockSpec((C2, 1), const2),
                  pl.BlockSpec((gph, L, L), const3),
                  pl.BlockSpec((gph, L, L), const3)],
        out_specs=pl.BlockSpec((2 * G3, L), const2),
        out_shape=jax.ShapeDtypeStruct((2 * G3, L), jnp.float32),
        compiler_params=pltpu.CompilerParams(dimension_semantics=("arbitrary",)),
    )(xb, w_eff, b_eff, q_emb, k_emb)

    n_sim = float(B * L * L)
    ch_sum = jnp.sum(stats[:G3], axis=1)
    ch_sq = jnp.sum(stats[G3:], axis=1)
    mean_sim = ch_sum / n_sim
    var_sim = jnp.maximum(ch_sq / n_sim - mean_sim ** 2, 0.0)
    scale_sim = p['bn_sim_gamma'] * lax.rsqrt(var_sim + EPS)
    shift_sim = p['bn_sim_beta'] - mean_sim * scale_sim
    sim_prm = jnp.stack([scale_sim, shift_sim], axis=0).astype(jnp.float32)   # (2, 3G) -> SMEM

    # ---- pass 2: attention core (grid over B, fully parallel) ----
    sv, sve = pl.pallas_call(
        attn_kernel,
        grid=(B,),
        in_specs=[pl.BlockSpec((1, C, L), lambda i: (i, 0, 0)),
                  pl.BlockSpec((C2, C), const2),
                  pl.BlockSpec((C2, 1), const2),
                  pl.BlockSpec((gph, L, L), const3),
                  pl.BlockSpec((gph, L, L), const3),
                  pl.BlockSpec((gp, L, L), const3),
                  pl.BlockSpec(memory_space=pltpu.MemorySpace.SMEM)],
        out_specs=[pl.BlockSpec((1, C, L), lambda i: (i, 0, 0)),
                   pl.BlockSpec((1, C, L), lambda i: (i, 0, 0))],
        out_shape=[jax.ShapeDtypeStruct((B, C, L), jnp.float32),
                   jax.ShapeDtypeStruct((B, C, L), jnp.float32)],
        compiler_params=pltpu.CompilerParams(dimension_semantics=("parallel",)),
    )(xb, w_eff, b_eff, q_emb, k_emb, v_emb, sim_prm)

    # ---- bn_output (training-mode) + phase sum (tiny per-channel affine, done in JAX) ----
    def _bn_apply(y, gamma, beta):
        mean = jnp.mean(y, axis=(0, 2))
        var = jnp.mean((y - mean[None, :, None]) ** 2, axis=(0, 2))
        s = gamma * lax.rsqrt(var + EPS)
        return (y - mean[None, :, None]) * s[None, :, None] + beta[None, :, None]

    sv_n = _bn_apply(sv, p['bn_out_gamma'][0::2], p['bn_out_beta'][0::2])
    sve_n = _bn_apply(sve, p['bn_out_gamma'][1::2], p['bn_out_beta'][1::2])
    out_b = sv_n + sve_n                                            # (B, C, L)

    if width:
        return jnp.transpose(out_b.reshape(N, H, C, W), (0, 2, 1, 3))
    return jnp.transpose(out_b.reshape(N, W, C, H), (0, 2, 3, 1))


# --------------------------------------------------------------------------------------
# axial_attn forward: height block -> width block -> residual ReLU (fused Pallas kernel)
# --------------------------------------------------------------------------------------
@functools.partial(jax.jit, static_argnames=("groups",))
def axial_attn_forward(x, height_params, width_params, groups=2):
    h_out = _axial_attention_forward(x, height_params, groups=groups, width=False)
    w_out = _axial_attention_forward(h_out, width_params, groups=groups, width=True)

    N, C, H, W = x.shape
    return pl.pallas_call(
        _residual_relu_kernel,
        grid=(N,),
        in_specs=[pl.BlockSpec((1, C, H, W), lambda i: (i, 0, 0, 0)),
                  pl.BlockSpec((1, C, H, W), lambda i: (i, 0, 0, 0))],
        out_specs=pl.BlockSpec((1, C, H, W), lambda i: (i, 0, 0, 0)),
        out_shape=jax.ShapeDtypeStruct((N, C, H, W), jnp.float32),
        compiler_params=pltpu.CompilerParams(dimension_semantics=("parallel",)),
    )(w_out, x)


# --------------------------------------------------------------------------------------
# Parameter init (matches PyTorch module defaults) and pure-JAX reference
# --------------------------------------------------------------------------------------
def init_axial_params(key, channel, kernel_size, groups=2):
    gp = channel // groups
    k1, k2 = jax.random.split(key)
    return dict(
        w_qkv=jax.random.normal(k1, (2 * channel, channel), jnp.float32) * (1.0 / channel) ** 0.5,
        relative=jax.random.normal(k2, (2 * gp, 2 * kernel_size - 1), jnp.float32) * (1.0 / gp) ** 0.5,
        bn_qkv_gamma=jnp.ones((2 * channel,), jnp.float32),
        bn_qkv_beta=jnp.zeros((2 * channel,), jnp.float32),
        bn_sim_gamma=jnp.ones((3 * groups,), jnp.float32),
        bn_sim_beta=jnp.zeros((3 * groups,), jnp.float32),
        bn_out_gamma=jnp.ones((2 * channel,), jnp.float32),
        bn_out_beta=jnp.zeros((2 * channel,), jnp.float32),
    )


def _bn_train_ref(y, gamma, beta):
    axes = (0,) + tuple(range(2, y.ndim))
    mean = jnp.mean(y, axis=axes, keepdims=True)
    var = jnp.mean((y - mean) ** 2, axis=axes, keepdims=True)
    shape = [1, y.shape[1]] + [1] * (y.ndim - 2)
    return (y - mean) * lax.rsqrt(var + EPS) * gamma.reshape(shape) + beta.reshape(shape)


def _axial_attention_ref(x, p, groups, width):
    N, C, H, W = x.shape
    if width:
        xb = jnp.transpose(x, (0, 2, 1, 3)).reshape(N * H, C, W); L = W
    else:
        xb = jnp.transpose(x, (0, 3, 1, 2)).reshape(N * W, C, H); L = H
    B = xb.shape[0]
    gp = C // groups
    gph = gp // 2
    qkv = _bn_train_ref(jnp.einsum('oc,bcl->bol', p['w_qkv'], xb),
                        p['bn_qkv_gamma'], p['bn_qkv_beta'])
    qkv = qkv.reshape(B, groups, 2 * gp, L)
    q, k, v = qkv[:, :, :gph], qkv[:, :, gph:2 * gph], qkv[:, :, 2 * gph:]
    qi = jnp.arange(L)[None, :]
    ki = jnp.arange(L)[:, None]
    idx = (ki - qi + L - 1).reshape(-1)
    emb = jnp.take(p['relative'], idx, axis=1).reshape(2 * gp, L, L)
    q_emb, k_emb, v_emb = emb[:gph], emb[gph:2 * gph], emb[2 * gph:]
    qr = jnp.einsum('bgci,cij->bgij', q, q_emb)
    kr = jnp.einsum('bgci,cij->bgij', k, k_emb).transpose(0, 1, 3, 2)
    qk = jnp.einsum('bgci,bgcj->bgij', q, k)
    stacked = _bn_train_ref(jnp.concatenate([qk, qr, kr], axis=1),
                            p['bn_sim_gamma'], p['bn_sim_beta'])
    sim = jax.nn.softmax(stacked.reshape(B, 3, groups, L, L).sum(axis=1), axis=3)
    sv = jnp.einsum('bgij,bgcj->bgci', sim, v)
    sve = jnp.einsum('bgij,cij->bgci', sim, v_emb)
    so = jnp.concatenate([sv, sve], axis=-1).reshape(B, 2 * C, L)
    so = _bn_train_ref(so, p['bn_out_gamma'], p['bn_out_beta'])
    out = so.reshape(B, C, 2, L).sum(axis=2)
    if width:
        return jnp.transpose(out.reshape(N, H, C, W), (0, 2, 1, 3))
    return jnp.transpose(out.reshape(N, W, C, H), (0, 2, 3, 1))


def _axial_attn_ref(x, hp, wp, groups=2):
    o = _axial_attention_ref(x, hp, groups, False)
    o = _axial_attention_ref(o, wp, groups, True)
    return jnp.maximum(o + x, 0.0)


# --------------------------------------------------------------------------------------
if __name__ == "__main__":
    key = jax.random.PRNGKey(0)
    kx, kh, kw = jax.random.split(key, 3)

    N, C, H, W = 2, 8, 16, 16     # channel=8, h_kernel=16, w_kernel=16, stride=1
    GROUPS = 2
    x = jax.random.normal(kx, (N, C, H, W), dtype=jnp.float32)
    hp = init_axial_params(kh, C, H, GROUPS)
    wp = init_axial_params(kw, C, W, GROUPS)

    out = jax.block_until_ready(axial_attn_forward(x, hp, wp, groups=GROUPS))

    ref = _axial_attn_ref(x, hp, wp, GROUPS)
    assert out.shape == (N, C, H, W), out.shape
    max_err = float(jnp.max(jnp.abs(out - ref)))
    assert bool(jnp.allclose(out, ref, atol=2e-3, rtol=2e-3)), f"max abs err {max_err}"

    print("KERNEL_OK")
</pallas_src>

<mosaic_0001>
module attributes {stable_mosaic.version = 11 : i64} {
  func.func @sim_stats_kernel(%arg0: i32, %arg1: memref<1x8x16xf32, #tpu.memory_space<vmem>>, %arg2: memref<16x8xf32, #tpu.memory_space<vmem>>, %arg3: memref<16x1xf32, #tpu.memory_space<vmem>>, %arg4: memref<2x16x16xf32, #tpu.memory_space<vmem>>, %arg5: memref<2x16x16xf32, #tpu.memory_space<vmem>>, %arg6: memref<12x16xf32, #tpu.memory_space<vmem>>) attributes {dimension_semantics = [#tpu.dimension_semantics<arbitrary>], iteration_bounds = array<i64: 32>, scalar_prefetch = 0 : i64, scratch_operands = 0 : i64, tpu.core_type = #tpu.core_type<tc>, window_params = [{transform_indices = @transform_0, window_bounds = array<i64: 1, 8, 16>}, {pipeline_mode = #tpu.pipeline_mode<synchronous>, transform_indices = @transform_1, window_bounds = array<i64: 16, 8>}, {pipeline_mode = #tpu.pipeline_mode<synchronous>, transform_indices = @transform_2, window_bounds = array<i64: 16, 1>}, {pipeline_mode = #tpu.pipeline_mode<synchronous>, transform_indices = @transform_3, window_bounds = array<i64: 2, 16, 16>}, {pipeline_mode = #tpu.pipeline_mode<synchronous>, transform_indices = @transform_4, window_bounds = array<i64: 2, 16, 16>}, {pipeline_mode = #tpu.pipeline_mode<synchronous>, transform_indices = @transform_5, window_bounds = array<i64: 12, 16>}]} {
    %c0_i32 = arith.constant 0 : i32
    %0 = arith.cmpi eq, %arg0, %c0_i32 : i32
    %1 = arith.extui %0 : i1 to i32
    %c0_i32_0 = arith.constant 0 : i32
    %2 = arith.cmpi ne, %1, %c0_i32_0 : i32
    scf.if %2 {
      %cst_41 = arith.constant 0.000000e+00 : f32
      %80 = vector.broadcast %cst_41 : f32 to vector<12x16xf32>
      %c0_42 = arith.constant 0 : index
      %c0_43 = arith.constant 0 : index
      %81 = vector.load %arg6[%c0_42, %c0_43] : memref<12x16xf32, #tpu.memory_space<vmem>>, vector<12x16xf32>
      tpu.vector_store %arg6[%c0_42, %c0_43], %80 {strides = array<i32>} : memref<12x16xf32, #tpu.memory_space<vmem>>, vector<12x16xf32>,
    } else {
    }
    %c0 = arith.constant 0 : index
    %c0_1 = arith.constant 0 : index
    %c0_2 = arith.constant 0 : index
    %3 = vector.load %arg1[%c0, %c0_1, %c0_2] : memref<1x8x16xf32, #tpu.memory_space<vmem>>, vector<1x8x16xf32>
    %4 = vector.shape_cast %3 : vector<1x8x16xf32> to vector<8x16xf32>
    %c0_3 = arith.constant 0 : index
    %c0_4 = arith.constant 0 : index
    %5 = vector.load %arg2[%c0_3, %c0_4] : memref<16x8xf32, #tpu.memory_space<vmem>>, vector<16x8xf32>
    %cst = arith.constant dense<0.000000e+00> : vector<16x16xf32>
    %6 = tpu.matmul %5, %4, %cst {dimension_numbers = #tpu.dot_dimension_numbers<[1], [0], [0], [1], [0, 0, 1, 1], [], []>} : vector<16x8xf32>, vector<8x16xf32>, vector<16x16xf32> -> vector<16x16xf32>
    %c0_5 = arith.constant 0 : index
    %c0_6 = arith.constant 0 : index
    %7 = vector.load %arg3[%c0_5, %c0_6] : memref<16x1xf32, #tpu.memory_space<vmem>>, vector<16x1xf32>
    %8 = vector.broadcast %7 : vector<16x1xf32> to vector<16x16xf32>
    %9 = arith.addf %6, %8 : vector<16x16xf32>
    %10 = vector.extract_strided_slice %9 {offsets = [0, 0], sizes = [2, 16], strides = [1, 1]} : vector<16x16xf32> to vector<2x16xf32>
    %11 = vector.extract_strided_slice %9 {offsets = [2, 0], sizes = [2, 16], strides = [1, 1]} : vector<16x16xf32> to vector<2x16xf32>
    %12 = vector.shape_cast %10 : vector<2x16xf32> to vector<2x16x1xf32>
    %13 = vector.shape_cast %11 : vector<2x16xf32> to vector<2x1x16xf32>
    %14 = vector.broadcast %12 : vector<2x16x1xf32> to vector<2x16x16xf32>
    %15 = vector.broadcast %13 : vector<2x1x16xf32> to vector<2x16x16xf32>
    %16 = arith.mulf %14, %15 : vector<2x16x16xf32>
    %cst_7 = arith.constant dense<0.000000e+00> : vector<16x16xf32>
    %17 = vector.multi_reduction <add>, %16, %cst_7 [0] : vector<2x16x16xf32> to vector<16x16xf32>
    %c0_8 = arith.constant 0 : index
    %c0_9 = arith.constant 0 : index
    %c0_10 = arith.constant 0 : index
    %18 = vector.load %arg4[%c0_8, %c0_9, %c0_10] : memref<2x16x16xf32, #tpu.memory_space<vmem>>, vector<2x16x16xf32>
    %19 = vector.shape_cast %10 : vector<2x16xf32> to vector<2x16x1xf32>
    %20 = vector.broadcast %19 : vector<2x16x1xf32> to vector<2x16x16xf32>
    %21 = arith.mulf %20, %18 : vector<2x16x16xf32>
    %cst_11 = arith.constant dense<0.000000e+00> : vector<16x16xf32>
    %22 = vector.multi_reduction <add>, %21, %cst_11 [0] : vector<2x16x16xf32> to vector<16x16xf32>
    %c0_12 = arith.constant 0 : index
    %c0_13 = arith.constant 0 : index
    %c0_14 = arith.constant 0 : index
    %23 = vector.load %arg5[%c0_12, %c0_13, %c0_14] : memref<2x16x16xf32, #tpu.memory_space<vmem>>, vector<2x16x16xf32>
    %24 = vector.shape_cast %11 : vector<2x16xf32> to vector<2x16x1xf32>
    %25 = vector.broadcast %24 : vector<2x16x1xf32> to vector<2x16x16xf32>
    %26 = arith.mulf %25, %23 : vector<2x16x16xf32>
    %cst_15 = arith.constant dense<0.000000e+00> : vector<16x16xf32>
    %27 = vector.multi_reduction <add>, %26, %cst_15 [0] : vector<2x16x16xf32> to vector<16x16xf32>
    %cst_16 = arith.constant dense<0.000000e+00> : vector<16xf32>
    %28 = vector.multi_reduction <add>, %17, %cst_16 [0] : vector<16x16xf32> to vector<16xf32>
    %29 = vector.shape_cast %28 : vector<16xf32> to vector<1x16xf32>
    %cst_17 = arith.constant dense<0.000000e+00> : vector<16xf32>
    %30 = vector.multi_reduction <add>, %22, %cst_17 [0] : vector<16x16xf32> to vector<16xf32>
    %31 = vector.shape_cast %30 : vector<16xf32> to vector<1x16xf32>
    %cst_18 = arith.constant dense<0.000000e+00> : vector<16xf32>
    %32 = vector.multi_reduction <add>, %27, %cst_18 [0] : vector<16x16xf32> to vector<16xf32>
    %33 = vector.shape_cast %32 : vector<16xf32> to vector<1x16xf32>
    %34 = arith.mulf %17, %17 : vector<16x16xf32>
    %cst_19 = arith.constant dense<0.000000e+00> : vector<16xf32>
    %35 = vector.multi_reduction <add>, %34, %cst_19 [0] : vector<16x16xf32> to vector<16xf32>
    %36 = vector.shape_cast %35 : vector<16xf32> to vector<1x16xf32>
    %37 = arith.mulf %22, %22 : vector<16x16xf32>
    %cst_20 = arith.constant dense<0.000000e+00> : vector<16xf32>
    %38 = vector.multi_reduction <add>, %37, %cst_20 [0] : vector<16x16xf32> to vector<16xf32>
    %39 = vector.shape_cast %38 : vector<16xf32> to vector<1x16xf32>
    %40 = arith.mulf %27, %27 : vector<16x16xf32>
    %cst_21 = arith.constant dense<0.000000e+00> : vector<16xf32>
    %41 = vector.multi_reduction <add>, %40, %cst_21 [0] : vector<16x16xf32> to vector<16xf32>
    %42 = vector.shape_cast %41 : vector<16xf32> to vector<1x16xf32>
    %43 = vector.extract_strided_slice %9 {offsets = [8, 0], sizes = [2, 16], strides = [1, 1]} : vector<16x16xf32> to vector<2x16xf32>
    %44 = vector.extract_strided_slice %9 {offsets = [10, 0], sizes = [2, 16], strides = [1, 1]} : vector<16x16xf32> to vector<2x16xf32>
    %45 = vector.shape_cast %43 : vector<2x16xf32> to vector<2x16x1xf32>
    %46 = vector.shape_cast %44 : vector<2x16xf32> to vector<2x1x16xf32>
    %47 = vector.broadcast %45 : vector<2x16x1xf32> to vector<2x16x16xf32>
    %48 = vector.broadcast %46 : vector<2x1x16xf32> to vector<2x16x16xf32>
    %49 = arith.mulf %47, %48 : vector<2x16x16xf32>
    %cst_22 = arith.constant dense<0.000000e+00> : vector<16x16xf32>
    %50 = vector.multi_reduction <add>, %49, %cst_22 [0] : vector<2x16x16xf32> to vector<16x16xf32>
    %c0_23 = arith.constant 0 : index
    %c0_24 = arith.constant 0 : index
    %c0_25 = arith.constant 0 : index
    %51 = vector.load %arg4[%c0_23, %c0_24, %c0_25] : memref<2x16x16xf32, #tpu.memory_space<vmem>>, vector<2x16x16xf32>
    %52 = vector.shape_cast %43 : vector<2x16xf32> to vector<2x16x1xf32>
    %53 = vector.broadcast %52 : vector<2x16x1xf32> to vector<2x16x16xf32>
    %54 = arith.mulf %53, %51 : vector<2x16x16xf32>
    %cst_26 = arith.constant dense<0.000000e+00> : vector<16x16xf32>
    %55 = vector.multi_reduction <add>, %54, %cst_26 [0] : vector<2x16x16xf32> to vector<16x16xf32>
    %c0_27 = arith.constant 0 : index
    %c0_28 = arith.constant 0 : index
    %c0_29 = arith.constant 0 : index
    %56 = vector.load %arg5[%c0_27, %c0_28, %c0_29] : memref<2x16x16xf32, #tpu.memory_space<vmem>>, vector<2x16x16xf32>
    %57 = vector.shape_cast %44 : vector<2x16xf32> to vector<2x16x1xf32>
    %58 = vector.broadcast %57 : vector<2x16x1xf32> to vector<2x16x16xf32>
    %59 = arith.mulf %58, %56 : vector<2x16x16xf32>
    %cst_30 = arith.constant dense<0.000000e+00> : vector<16x16xf32>
    %60 = vector.multi_reduction <add>, %59, %cst_30 [0] : vector<2x16x16xf32> to vector<16x16xf32>
    %cst_31 = arith.constant dense<0.000000e+00> : vector<16xf32>
    %61 = vector.multi_reduction <add>, %50, %cst_31 [0] : vector<16x16xf32> to vector<16xf32>
    %62 = vector.shape_cast %61 : vector<16xf32> to vector<1x16xf32>
    %cst_32 = arith.constant dense<0.000000e+00> : vector<16xf32>
    %63 = vector.multi_reduction <add>, %55, %cst_32 [0] : vector<16x16xf32> to vector<16xf32>
    %64 = vector.shape_cast %63 : vector<16xf32> to vector<1x16xf32>
    %cst_33 = arith.constant dense<0.000000e+00> : vector<16xf32>
    %65 = vector.multi_reduction <add>, %60, %cst_33 [0] : vector<16x16xf32> to vector<16xf32>
    %66 = vector.shape_cast %65 : vector<16xf32> to vector<1x16xf32>
    %67 = arith.mulf %50, %50 : vector<16x16xf32>
    %cst_34 = arith.constant dense<0.000000e+00> : vector<16xf32>
    %68 = vector.multi_reduction <add>, %67, %cst_34 [0] : vector<16x16xf32> to vector<16xf32>
    %69 = vector.shape_cast %68 : vector<16xf32> to vector<1x16xf32>
    %70 = arith.mulf %55, %55 : vector<16x16xf32>
    %cst_35 = arith.constant dense<0.000000e+00> : vector<16xf32>
    %71 = vector.multi_reduction <add>, %70, %cst_35 [0] : vector<16x16xf32> to vector<16xf32>
    %72 = vector.shape_cast %71 : vector<16xf32> to vector<1x16xf32>
    %73 = arith.mulf %60, %60 : vector<16x16xf32>
    %cst_36 = arith.constant dense<0.000000e+00> : vector<16xf32>
    %74 = vector.multi_reduction <add>, %73, %cst_36 [0] : vector<16x16xf32> to vector<16xf32>
    %75 = vector.shape_cast %74 : vector<16xf32> to vector<1x16xf32>
    %76 = tpu.concatenate %29, %62, %31, %64, %33, %66, %36, %69, %39, %72, %42, %75 in 0 : vector<1x16xf32>, vector<1x16xf32>, vector<1x16xf32>, vector<1x16xf32>, vector<1x16xf32>, vector<1x16xf32>, vector<1x16xf32>, vector<1x16xf32>, vector<1x16xf32>, vector<1x16xf32>, vector<1x16xf32>, vector<1x16xf32> -> vector<12x16xf32>
    %c0_37 = arith.constant 0 : index
    %c0_38 = arith.constant 0 : index
    %77 = vector.load %arg6[%c0_37, %c0_38] : memref<12x16xf32, #tpu.memory_space<vmem>>, vector<12x16xf32>
    %78 = arith.addf %77, %76 : vector<12x16xf32>
    %c0_39 = arith.constant 0 : index
    %c0_40 = arith.constant 0 : index
    %79 = vector.load %arg6[%c0_39, %c0_40] : memref<12x16xf32, #tpu.memory_space<vmem>>, vector<12x16xf32>
    tpu.vector_store %arg6[%c0_39, %c0_40], %78 {strides = array<i32>} : memref<12x16xf32, #tpu.memory_space<vmem>>, vector<12x16xf32>,
    return
  }
  func.func @transform_0(%arg0: i32) -> (i32, i32, i32) {
    %c0_i32 = arith.constant 0 : i32
    %c0_i32_0 = arith.constant 0 : i32
    %c0_i32_1 = arith.constant 0 : i32
    return %arg0, %c0_i32, %c0_i32_0 : i32, i32, i32
  }
  func.func @transform_1(%arg0: i32) -> (i32, i32) {
    %c0_i32 = arith.constant 0 : i32
    %c0_i32_0 = arith.constant 0 : i32
    %c0_i32_1 = arith.constant 0 : i32
    return %c0_i32, %c0_i32_0 : i32, i32
  }
  func.func @transform_2(%arg0: i32) -> (i32, i32) {
    %c0_i32 = arith.constant 0 : i32
    %c0_i32_0 = arith.constant 0 : i32
    %c0_i32_1 = arith.constant 0 : i32
    return %c0_i32, %c0_i32_0 : i32, i32
  }
  func.func @transform_3(%arg0: i32) -> (i32, i32, i32) {
    %c0_i32 = arith.constant 0 : i32
    %c0_i32_0 = arith.constant 0 : i32
    %c0_i32_1 = arith.constant 0 : i32
    %c0_i32_2 = arith.constant 0 : i32
    return %c0_i32, %c0_i32_0, %c0_i32_1 : i32, i32, i32
  }
  func.func @transform_4(%arg0: i32) -> (i32, i32, i32) {
    %c0_i32 = arith.constant 0 : i32
    %c0_i32_0 = arith.constant 0 : i32
    %c0_i32_1 = arith.constant 0 : i32
    %c0_i32_2 = arith.constant 0 : i32
    return %c0_i32, %c0_i32_0, %c0_i32_1 : i32, i32, i32
  }
  func.func @transform_5(%arg0: i32) -> (i32, i32) {
    %c0_i32 = arith.constant 0 : i32
    %c0_i32_0 = arith.constant 0 : i32
    %c0_i32_1 = arith.constant 0 : i32
    return %c0_i32, %c0_i32_0 : i32, i32
  }
}

module attributes {stable_mosaic.version = 11 : i64} {
  func.func @attn_kernel(%arg0: i32, %arg1: memref<1x8x16xf32, #tpu.memory_space<vmem>>, %arg2: memref<16x8xf32, #tpu.memory_space<vmem>>, %arg3: memref<16x1xf32, #tpu.memory_space<vmem>>, %arg4: memref<2x16x16xf32, #tpu.memory_space<vmem>>, %arg5: memref<2x16x16xf32, #tpu.memory_space<vmem>>, %arg6: memref<4x16x16xf32, #tpu.memory_space<vmem>>, %arg7: memref<2x6xf32, #tpu.memory_space<smem>>, %arg8: memref<1x8x16xf32, #tpu.memory_space<vmem>>, %arg9: memref<1x8x16xf32, #tpu.memory_space<vmem>>) attributes {dimension_semantics = [#tpu.dimension_semantics<parallel>], iteration_bounds = array<i64: 32>, scalar_prefetch = 0 : i64, scratch_operands = 0 : i64, tpu.core_type = #tpu.core_type<tc>, window_params = [{transform_indices = @transform_0, window_bounds = array<i64: 1, 8, 16>}, {pipeline_mode = #tpu.pipeline_mode<synchronous>, transform_indices = @transform_1, window_bounds = array<i64: 16, 8>}, {pipeline_mode = #tpu.pipeline_mode<synchronous>, transform_indices = @transform_2, window_bounds = array<i64: 16, 1>}, {pipeline_mode = #tpu.pipeline_mode<synchronous>, transform_indices = @transform_3, window_bounds = array<i64: 2, 16, 16>}, {pipeline_mode = #tpu.pipeline_mode<synchronous>, transform_indices = @transform_4, window_bounds = array<i64: 2, 16, 16>}, {pipeline_mode = #tpu.pipeline_mode<synchronous>, transform_indices = @transform_5, window_bounds = array<i64: 4, 16, 16>}, {transform_indices = @transform_6, window_bounds = array<i64: 2, 6>}, {transform_indices = @transform_7, window_bounds = array<i64: 1, 8, 16>}, {transform_indices = @transform_8, window_bounds = array<i64: 1, 8, 16>}]} {
    %c0 = arith.constant 0 : index
    %c0_0 = arith.constant 0 : index
    %c0_1 = arith.constant 0 : index
    %0 = vector.load %arg1[%c0, %c0_0, %c0_1] : memref<1x8x16xf32, #tpu.memory_space<vmem>>, vector<1x8x16xf32>
    %1 = vector.shape_cast %0 : vector<1x8x16xf32> to vector<8x16xf32>
    %c0_2 = arith.constant 0 : index
    %c0_3 = arith.constant 0 : index
    %2 = vector.load %arg2[%c0_2, %c0_3] : memref<16x8xf32, #tpu.memory_space<vmem>>, vector<16x8xf32>
    %cst = arith.constant dense<0.000000e+00> : vector<16x16xf32>
    %3 = tpu.matmul %2, %1, %cst {dimension_numbers = #tpu.dot_dimension_numbers<[1], [0], [0], [1], [0, 0, 1, 1], [], []>} : vector<16x8xf32>, vector<8x16xf32>, vector<16x16xf32> -> vector<16x16xf32>
    %c0_4 = arith.constant 0 : index
    %c0_5 = arith.constant 0 : index
    %4 = vector.load %arg3[%c0_4, %c0_5] : memref<16x1xf32, #tpu.memory_space<vmem>>, vector<16x1xf32>
    %5 = vector.broadcast %4 : vector<16x1xf32> to vector<16x16xf32>
    %6 = arith.addf %3, %5 : vector<16x16xf32>
    %7 = vector.extract_strided_slice %6 {offsets = [0, 0], sizes = [2, 16], strides = [1, 1]} : vector<16x16xf32> to vector<2x16xf32>
    %8 = vector.extract_strided_slice %6 {offsets = [2, 0], sizes = [2, 16], strides = [1, 1]} : vector<16x16xf32> to vector<2x16xf32>
    %9 = vector.extract_strided_slice %6 {offsets = [4, 0], sizes = [4, 16], strides = [1, 1]} : vector<16x16xf32> to vector<4x16xf32>
    %10 = vector.shape_cast %7 : vector<2x16xf32> to vector<2x16x1xf32>
    %11 = vector.shape_cast %8 : vector<2x16xf32> to vector<2x1x16xf32>
    %12 = vector.broadcast %10 : vector<2x16x1xf32> to vector<2x16x16xf32>
    %13 = vector.broadcast %11 : vector<2x1x16xf32> to vector<2x16x16xf32>
    %14 = arith.mulf %12, %13 : vector<2x16x16xf32>
    %cst_6 = arith.constant dense<0.000000e+00> : vector<16x16xf32>
    %15 = vector.multi_reduction <add>, %14, %cst_6 [0] : vector<2x16x16xf32> to vector<16x16xf32>
    %c0_7 = arith.constant 0 : index
    %c0_8 = arith.constant 0 : index
    %c0_9 = arith.constant 0 : index
    %16 = vector.load %arg4[%c0_7, %c0_8, %c0_9] : memref<2x16x16xf32, #tpu.memory_space<vmem>>, vector<2x16x16xf32>
    %17 = vector.shape_cast %7 : vector<2x16xf32> to vector<2x16x1xf32>
    %18 = vector.broadcast %17 : vector<2x16x1xf32> to vector<2x16x16xf32>
    %19 = arith.mulf %18, %16 : vector<2x16x16xf32>
    %cst_10 = arith.constant dense<0.000000e+00> : vector<16x16xf32>
    %20 = vector.multi_reduction <add>, %19, %cst_10 [0] : vector<2x16x16xf32> to vector<16x16xf32>
    %c0_11 = arith.constant 0 : index
    %c0_12 = arith.constant 0 : index
    %c0_13 = arith.constant 0 : index
    %21 = vector.load %arg5[%c0_11, %c0_12, %c0_13] : memref<2x16x16xf32, #tpu.memory_space<vmem>>, vector<2x16x16xf32>
    %22 = vector.shape_cast %8 : vector<2x16xf32> to vector<2x16x1xf32>
    %23 = vector.broadcast %22 : vector<2x16x1xf32> to vector<2x16x16xf32>
    %24 = arith.mulf %23, %21 : vector<2x16x16xf32>
    %cst_14 = arith.constant dense<0.000000e+00> : vector<16x16xf32>
    %25 = vector.multi_reduction <add>, %24, %cst_14 [0] : vector<2x16x16xf32> to vector<16x16xf32>
    %26 = tpu.transpose %25, [1, 0] : vector<16x16xf32> -> vector<16x16xf32>
    %c0_15 = arith.constant 0 : index
    %c0_16 = arith.constant 0 : index
    %27 = memref.load %arg7[%c0_15, %c0_16] : memref<2x6xf32, #tpu.memory_space<smem>>
    %28 = vector.broadcast %27 : f32 to vector<16x16xf32>
    %29 = arith.mulf %15, %28 : vector<16x16xf32>
    %c0_17 = arith.constant 0 : index
    %c2 = arith.constant 2 : index
    %30 = memref.load %arg7[%c0_17, %c2] : memref<2x6xf32, #tpu.memory_space<smem>>
    %31 = vector.broadcast %30 : f32 to vector<16x16xf32>
    %32 = arith.mulf %20, %31 : vector<16x16xf32>
    %33 = arith.addf %29, %32 : vector<16x16xf32>
    %c0_18 = arith.constant 0 : index
    %c4 = arith.constant 4 : index
    %34 = memref.load %arg7[%c0_18, %c4] : memref<2x6xf32, #tpu.memory_space<smem>>
    %35 = vector.broadcast %34 : f32 to vector<16x16xf32>
    %36 = arith.mulf %26, %35 : vector<16x16xf32>
    %37 = arith.addf %33, %36 : vector<16x16xf32>
    %c1 = arith.constant 1 : index
    %c0_19 = arith.constant 0 : index
    %38 = memref.load %arg7[%c1, %c0_19] : memref<2x6xf32, #tpu.memory_space<smem>>
    %c1_20 = arith.constant 1 : index
    %c2_21 = arith.constant 2 : index
    %39 = memref.load %arg7[%c1_20, %c2_21] : memref<2x6xf32, #tpu.memory_space<smem>>
    %40 = arith.addf %38, %39 : f32
    %c1_22 = arith.constant 1 : index
    %c4_23 = arith.constant 4 : index
    %41 = memref.load %arg7[%c1_22, %c4_23] : memref<2x6xf32, #tpu.memory_space<smem>>
    %42 = arith.addf %40, %41 : f32
    %43 = vector.broadcast %42 : f32 to vector<16x16xf32>
    %44 = arith.addf %37, %43 : vector<16x16xf32>
    %cst_24 = arith.constant dense<0xFF800000> : vector<16xf32>
    %45 = vector.multi_reduction <maximumf>, %44, %cst_24 [1] : vector<16x16xf32> to vector<16xf32>
    %46 = vector.shape_cast %45 : vector<16xf32> to vector<16x1xf32>
    %47 = vector.broadcast %46 : vector<16x1xf32> to vector<16x16xf32>
    %48 = arith.subf %44, %47 : vector<16x16xf32>
    %49 = math.exp %48 : vector<16x16xf32>
    %cst_25 = arith.constant dense<0.000000e+00> : vector<16xf32>
    %50 = vector.multi_reduction <add>, %49, %cst_25 [1] : vector<16x16xf32> to vector<16xf32>
    %51 = vector.shape_cast %50 : vector<16xf32> to vector<16x1xf32>
    %52 = vector.broadcast %51 : vector<16x1xf32> to vector<16x16xf32>
    %53 = arith.divf %49, %52 : vector<16x16xf32>
    %cst_26 = arith.constant dense<0.000000e+00> : vector<4x16xf32>
    %54 = tpu.matmul %9, %53, %cst_26 {dimension_numbers = #tpu.dot_dimension_numbers<[1], [1], [0], [0], [0, 0, 1, 0], [], []>} : vector<4x16xf32>, vector<16x16xf32>, vector<4x16xf32> -> vector<4x16xf32>
    %c0_27 = arith.constant 0 : index
    %c0_28 = arith.constant 0 : index
    %c0_29 = arith.constant 0 : index
    %55 = vector.load %arg6[%c0_27, %c0_28, %c0_29] : memref<4x16x16xf32, #tpu.memory_space<vmem>>, vector<4x16x16xf32>
    %56 = vector.shape_cast %53 : vector<16x16xf32> to vector<1x16x16xf32>
    %57 = vector.broadcast %56 : vector<1x16x16xf32> to vector<4x16x16xf32>
    %58 = arith.mulf %55, %57 : vector<4x16x16xf32>
    %cst_30 = arith.constant dense<0.000000e+00> : vector<4x16xf32>
    %59 = vector.multi_reduction <add>, %58, %cst_30 [2] : vector<4x16x16xf32> to vector<4x16xf32>
    %60 = vector.extract_strided_slice %6 {offsets = [8, 0], sizes = [2, 16], strides = [1, 1]} : vector<16x16xf32> to vector<2x16xf32>
    %61 = vector.extract_strided_slice %6 {offsets = [10, 0], sizes = [2, 16], strides = [1, 1]} : vector<16x16xf32> to vector<2x16xf32>
    %62 = vector.extract_strided_slice %6 {offsets = [12, 0], sizes = [4, 16], strides = [1, 1]} : vector<16x16xf32> to vector<4x16xf32>
    %63 = vector.shape_cast %60 : vector<2x16xf32> to vector<2x16x1xf32>
    %64 = vector.shape_cast %61 : vector<2x16xf32> to vector<2x1x16xf32>
    %65 = vector.broadcast %63 : vector<2x16x1xf32> to vector<2x16x16xf32>
    %66 = vector.broadcast %64 : vector<2x1x16xf32> to vector<2x16x16xf32>
    %67 = arith.mulf %65, %66 : vector<2x16x16xf32>
    %cst_31 = arith.constant dense<0.000000e+00> : vector<16x16xf32>
    %68 = vector.multi_reduction <add>, %67, %cst_31 [0] : vector<2x16x16xf32> to vector<16x16xf32>
    %c0_32 = arith.constant 0 : index
    %c0_33 = arith.constant 0 : index
    %c0_34 = arith.constant 0 : index
    %69 = vector.load %arg4[%c0_32, %c0_33, %c0_34] : memref<2x16x16xf32, #tpu.memory_space<vmem>>, vector<2x16x16xf32>
    %70 = vector.shape_cast %60 : vector<2x16xf32> to vector<2x16x1xf32>
    %71 = vector.broadcast %70 : vector<2x16x1xf32> to vector<2x16x16xf32>
    %72 = arith.mulf %71, %69 : vector<2x16x16xf32>
    %cst_35 = arith.constant dense<0.000000e+00> : vector<16x16xf32>
    %73 = vector.multi_reduction <add>, %72, %cst_35 [0] : vector<2x16x16xf32> to vector<16x16xf32>
    %c0_36 = arith.constant 0 : index
    %c0_37 = arith.constant 0 : index
    %c0_38 = arith.constant 0 : index
    %74 = vector.load %arg5[%c0_36, %c0_37, %c0_38] : memref<2x16x16xf32, #tpu.memory_space<vmem>>, vector<2x16x16xf32>
    %75 = vector.shape_cast %61 : vector<2x16xf32> to vector<2x16x1xf32>
    %76 = vector.broadcast %75 : vector<2x16x1xf32> to vector<2x16x16xf32>
    %77 = arith.mulf %76, %74 : vector<2x16x16xf32>
    %cst_39 = arith.constant dense<0.000000e+00> : vector<16x16xf32>
    %78 = vector.multi_reduction <add>, %77, %cst_39 [0] : vector<2x16x16xf32> to vector<16x16xf32>
    %79 = tpu.transpose %78, [1, 0] : vector<16x16xf32> -> vector<16x16xf32>
    %c0_40 = arith.constant 0 : index
    %c1_41 = arith.constant 1 : index
    %80 = memref.load %arg7[%c0_40, %c1_41] : memref<2x6xf32, #tpu.memory_space<smem>>
    %81 = vector.broadcast %80 : f32 to vector<16x16xf32>
    %82 = arith.mulf %68, %81 : vector<16x16xf32>
    %c0_42 = arith.constant 0 : index
    %c3 = arith.constant 3 : index
    %83 = memref.load %arg7[%c0_42, %c3] : memref<2x6xf32, #tpu.memory_space<smem>>
    %84 = vector.broadcast %83 : f32 to vector<16x16xf32>
    %85 = arith.mulf %73, %84 : vector<16x16xf32>
    %86 = arith.addf %82, %85 : vector<16x16xf32>
    %c0_43 = arith.constant 0 : index
    %c5 = arith.constant 5 : index
    %87 = memref.load %arg7[%c0_43, %c5] : memref<2x6xf32, #tpu.memory_space<smem>>
    %88 = vector.broadcast %87 : f32 to vector<16x16xf32>
    %89 = arith.mulf %79, %88 : vector<16x16xf32>
    %90 = arith.addf %86, %89 : vector<16x16xf32>
    %c1_44 = arith.constant 1 : index
    %c1_45 = arith.constant 1 : index
    %91 = memref.load %arg7[%c1_44, %c1_45] : memref<2x6xf32, #tpu.memory_space<smem>>
    %c1_46 = arith.constant 1 : index
    %c3_47 = arith.constant 3 : index
    %92 = memref.load %arg7[%c1_46, %c3_47] : memref<2x6xf32, #tpu.memory_space<smem>>
    %93 = arith.addf %91, %92 : f32
    %c1_48 = arith.constant 1 : index
    %c5_49 = arith.constant 5 : index
    %94 = memref.load %arg7[%c1_48, %c5_49] : memref<2x6xf32, #tpu.memory_space<smem>>
    %95 = arith.addf %93, %94 : f32
    %96 = vector.broadcast %95 : f32 to vector<16x16xf32>
    %97 = arith.addf %90, %96 : vector<16x16xf32>
    %cst_50 = arith.constant dense<0xFF800000> : vector<16xf32>
    %98 = vector.multi_reduction <maximumf>, %97, %cst_50 [1] : vector<16x16xf32> to vector<16xf32>
    %99 = vector.shape_cast %98 : vector<16xf32> to vector<16x1xf32>
    %100 = vector.broadcast %99 : vector<16x1xf32> to vector<16x16xf32>
    %101 = arith.subf %97, %100 : vector<16x16xf32>
    %102 = math.exp %101 : vector<16x16xf32>
    %cst_51 = arith.constant dense<0.000000e+00> : vector<16xf32>
    %103 = vector.multi_reduction <add>, %102, %cst_51 [1] : vector<16x16xf32> to vector<16xf32>
    %104 = vector.shape_cast %103 : vector<16xf32> to vector<16x1xf32>
    %105 = vector.broadcast %104 : vector<16x1xf32> to vector<16x16xf32>
    %106 = arith.divf %102, %105 : vector<16x16xf32>
    %cst_52 = arith.constant dense<0.000000e+00> : vector<4x16xf32>
    %107 = tpu.matmul %62, %106, %cst_52 {dimension_numbers = #tpu.dot_dimension_numbers<[1], [1], [0], [0], [0, 0, 1, 0], [], []>} : vector<4x16xf32>, vector<16x16xf32>, vector<4x16xf32> -> vector<4x16xf32>
    %c0_53 = arith.constant 0 : index
    %c0_54 = arith.constant 0 : index
    %c0_55 = arith.constant 0 : index
    %108 = vector.load %arg6[%c0_53, %c0_54, %c0_55] : memref<4x16x16xf32, #tpu.memory_space<vmem>>, vector<4x16x16xf32>
    %109 = vector.shape_cast %106 : vector<16x16xf32> to vector<1x16x16xf32>
    %110 = vector.broadcast %109 : vector<1x16x16xf32> to vector<4x16x16xf32>
    %111 = arith.mulf %108, %110 : vector<4x16x16xf32>
    %cst_56 = arith.constant dense<0.000000e+00> : vector<4x16xf32>
    %112 = vector.multi_reduction <add>, %111, %cst_56 [2] : vector<4x16x16xf32> to vector<4x16xf32>
    %113 = tpu.concatenate %54, %107 in 0 : vector<4x16xf32>, vector<4x16xf32> -> vector<8x16xf32>
    %c0_57 = arith.constant 0 : index
    %c0_58 = arith.constant 0 : index
    %c0_59 = arith.constant 0 : index
    %114 = vector.load %arg8[%c0_57, %c0_58, %c0_59] : memref<1x8x16xf32, #tpu.memory_space<vmem>>, vector<1x8x16xf32>
    %115 = vector.shape_cast %114 : vector<1x8x16xf32> to vector<8x16xf32>
    %116 = vector.shape_cast %113 : vector<8x16xf32> to vector<1x8x16xf32>
    tpu.vector_store %arg8[%c0_57, %c0_58, %c0_59], %116 {strides = array<i32>} : memref<1x8x16xf32, #tpu.memory_space<vmem>>, vector<1x8x16xf32>,
    %117 = tpu.concatenate %59, %112 in 0 : vector<4x16xf32>, vector<4x16xf32> -> vector<8x16xf32>
    %c0_60 = arith.constant 0 : index
    %c0_61 = arith.constant 0 : index
    %c0_62 = arith.constant 0 : index
    %118 = vector.load %arg9[%c0_60, %c0_61, %c0_62] : memref<1x8x16xf32, #tpu.memory_space<vmem>>, vector<1x8x16xf32>
    %119 = vector.shape_cast %118 : vector<1x8x16xf32> to vector<8x16xf32>
    %120 = vector.shape_cast %117 : vector<8x16xf32> to vector<1x8x16xf32>
    tpu.vector_store %arg9[%c0_60, %c0_61, %c0_62], %120 {strides = array<i32>} : memref<1x8x16xf32, #tpu.memory_space<vmem>>, vector<1x8x16xf32>,
    return
  }
  func.func @transform_0(%arg0: i32) -> (i32, i32, i32) {
    %c0_i32 = arith.constant 0 : i32
    %c0_i32_0 = arith.constant 0 : i32
    %c0_i32_1 = arith.constant 0 : i32
    return %arg0, %c0_i32, %c0_i32_0 : i32, i32, i32
  }
  func.func @transform_1(%arg0: i32) -> (i32, i32) {
    %c0_i32 = arith.constant 0 : i32
    %c0_i32_0 = arith.constant 0 : i32
    %c0_i32_1 = arith.constant 0 : i32
    return %c0_i32, %c0_i32_0 : i32, i32
  }
  func.func @transform_2(%arg0: i32) -> (i32, i32) {
    %c0_i32 = arith.constant 0 : i32
    %c0_i32_0 = arith.constant 0 : i32
    %c0_i32_1 = arith.constant 0 : i32
    return %c0_i32, %c0_i32_0 : i32, i32
  }
  func.func @transform_3(%arg0: i32) -> (i32, i32, i32) {
    %c0_i32 = arith.constant 0 : i32
    %c0_i32_0 = arith.constant 0 : i32
    %c0_i32_1 = arith.constant 0 : i32
    %c0_i32_2 = arith.constant 0 : i32
    return %c0_i32, %c0_i32_0, %c0_i32_1 : i32, i32, i32
  }
  func.func @transform_4(%arg0: i32) -> (i32, i32, i32) {
    %c0_i32 = arith.constant 0 : i32
    %c0_i32_0 = arith.constant 0 : i32
    %c0_i32_1 = arith.constant 0 : i32
    %c0_i32_2 = arith.constant 0 : i32
    return %c0_i32, %c0_i32_0, %c0_i32_1 : i32, i32, i32
  }
  func.func @transform_5(%arg0: i32) -> (i32, i32, i32) {
    %c0_i32 = arith.constant 0 : i32
    %c0_i32_0 = arith.constant 0 : i32
    %c0_i32_1 = arith.constant 0 : i32
    %c0_i32_2 = arith.constant 0 : i32
    return %c0_i32, %c0_i32_0, %c0_i32_1 : i32, i32, i32
  }
  func.func @transform_6(%arg0: i32) -> (i32, i32) {
    %c0_i32 = arith.constant 0 : i32
    %c0_i32_0 = arith.constant 0 : i32
    %c0_i32_1 = arith.constant 0 : i32
    return %c0_i32, %c0_i32_0 : i32, i32
  }
  func.func @transform_7(%arg0: i32) -> (i32, i32, i32) {
    %c0_i32 = arith.constant 0 : i32
    %c0_i32_0 = arith.constant 0 : i32
    %c0_i32_1 = arith.constant 0 : i32
    return %arg0, %c0_i32, %c0_i32_0 : i32, i32, i32
  }
  func.func @transform_8(%arg0: i32) -> (i32, i32, i32) {
    %c0_i32 = arith.constant 0 : i32
    %c0_i32_0 = arith.constant 0 : i32
    %c0_i32_1 = arith.constant 0 : i32
    return %arg0, %c0_i32, %c0_i32_0 : i32, i32, i32
  }
}

module attributes {stable_mosaic.version = 11 : i64} {
  func.func @_residual_relu_kernel(%arg0: i32, %arg1: memref<1x8x16x16xf32, #tpu.memory_space<vmem>>, %arg2: memref<1x8x16x16xf32, #tpu.memory_space<vmem>>, %arg3: memref<1x8x16x16xf32, #tpu.memory_space<vmem>>) attributes {dimension_semantics = [#tpu.dimension_semantics<parallel>], iteration_bounds = array<i64: 2>, scalar_prefetch = 0 : i64, scratch_operands = 0 : i64, tpu.core_type = #tpu.core_type<tc>, window_params = [{transform_indices = @transform_0, window_bounds = array<i64: 1, 8, 16, 16>}, {transform_indices = @transform_1, window_bounds = array<i64: 1, 8, 16, 16>}, {transform_indices = @transform_2, window_bounds = array<i64: 1, 8, 16, 16>}]} {
    %c0 = arith.constant 0 : index
    %c0_0 = arith.constant 0 : index
    %c0_1 = arith.constant 0 : index
    %c0_2 = arith.constant 0 : index
    %0 = vector.load %arg1[%c0, %c0_0, %c0_1, %c0_2] : memref<1x8x16x16xf32, #tpu.memory_space<vmem>>, vector<1x8x16x16xf32>
    %c0_3 = arith.constant 0 : index
    %c0_4 = arith.constant 0 : index
    %c0_5 = arith.constant 0 : index
    %c0_6 = arith.constant 0 : index
    %1 = vector.load %arg2[%c0_3, %c0_4, %c0_5, %c0_6] : memref<1x8x16x16xf32, #tpu.memory_space<vmem>>, vector<1x8x16x16xf32>
    %2 = arith.addf %0, %1 : vector<1x8x16x16xf32>
    %cst = arith.constant 0.000000e+00 : f32
    %3 = vector.broadcast %cst : f32 to vector<1x8x16x16xf32>
    %4 = arith.maximumf %2, %3 : vector<1x8x16x16xf32>
    %c0_7 = arith.constant 0 : index
    %c0_8 = arith.constant 0 : index
    %c0_9 = arith.constant 0 : index
    %c0_10 = arith.constant 0 : index
    %5 = vector.load %arg3[%c0_7, %c0_8, %c0_9, %c0_10] : memref<1x8x16x16xf32, #tpu.memory_space<vmem>>, vector<1x8x16x16xf32>
    tpu.vector_store %arg3[%c0_7, %c0_8, %c0_9, %c0_10], %4 {strides = array<i32>} : memref<1x8x16x16xf32, #tpu.memory_space<vmem>>, vector<1x8x16x16xf32>,
    return
  }
  func.func @transform_0(%arg0: i32) -> (i32, i32, i32, i32) {
    %c0_i32 = arith.constant 0 : i32
    %c0_i32_0 = arith.constant 0 : i32
    %c0_i32_1 = arith.constant 0 : i32
    %c0_i32_2 = arith.constant 0 : i32
    return %arg0, %c0_i32, %c0_i32_0, %c0_i32_1 : i32, i32, i32, i32
  }
  func.func @transform_1(%arg0: i32) -> (i32, i32, i32, i32) {
    %c0_i32 = arith.constant 0 : i32
    %c0_i32_0 = arith.constant 0 : i32
    %c0_i32_1 = arith.constant 0 : i32
    %c0_i32_2 = arith.constant 0 : i32
    return %arg0, %c0_i32, %c0_i32_0, %c0_i32_1 : i32, i32, i32, i32
  }
  func.func @transform_2(%arg0: i32) -> (i32, i32, i32, i32) {
    %c0_i32 = arith.constant 0 : i32
    %c0_i32_0 = arith.constant 0 : i32
    %c0_i32_1 = arith.constant 0 : i32
    %c0_i32_2 = arith.constant 0 : i32
    return %arg0, %c0_i32, %c0_i32_0, %c0_i32_1 : i32, i32, i32, i32
  }
}

</mosaic_0001>

<llo_original>
// kernel: axial_attn_forward.5
$region0: #{axial_attn_forward.5}
  #allocation0 [shape = 'u32[]', space=smem, size = 0x4, offset = 0x4, fixed_abs, tag = 'smem constant byte address 0x4 - core index']
  #allocation1 [shape = 'u32[144,128]{1,0:T(1,128)}', space=vmem, size = 0x12000, scoped, tag = 'internal scratch']
  %s0 = inlined_call_operand.vmem [shape: f32[32,8,16], index: 0, kind: input, shape index: {}]
  %s1 = inlined_call_operand.vmem [shape: f32[16,8], index: 1, kind: input, shape index: {}]
  %s2 = inlined_call_operand.vmem [shape: f32[16,1], index: 2, kind: input, shape index: {}]
  %s3 = inlined_call_operand.vmem [shape: f32[2,16,16], index: 3, kind: input, shape index: {}]
  %s4 = inlined_call_operand.vmem [shape: f32[2,16,16], index: 4, kind: input, shape index: {}]
  %s5 = inlined_call_operand.vmem [shape: f32[12,16], index: 5, kind: output, shape index: {}]
  %s6 = sld [smem:[#allocation0]]
  $region57: #{axial_attn_forward.5} parent=0
    _
  %s8 = ssub.s32 1, %s6
  %s9 = scalar_select 0, %s8, %s6
  loop: start=0, step=1, limit=34
  $region2: #{axial_attn_forward.5} parent=0 // loop_pre_header
    _
  $region3: #{axial_attn_forward.5} parent=0 // loop_header
    %s11 = sphi 0, %s15
    %p12 = scmp.ge.s32.totalorder %s11, 34
    %s21 = sphi 0, %s23
    %s24 = sphi 0, %s21
    %s25 = sphi 0, %s24
    %s41 = sphi 0, %s25
    %s45 = sphi 0, %s45
    %s47 = sphi 0, %s45
    %s48 = sphi 0, %s47
    %s62 = sphi 0, %s48
    %s66 = sphi 0, %s66
    %s68 = sphi 0, %s66
    %s69 = sphi 0, %s68
    %s83 = sphi 0, %s69
    %s87 = sphi 0, %s87
    %s89 = sphi 0, %s87
    %s90 = sphi 0, %s89
    %s104 = sphi 0, %s90
    %s108 = sphi 0, %s108
    %s110 = sphi 0, %s108
    %s111 = sphi 0, %s110
    %s125 = sphi 0, %s111
    %s129 = sphi 0, %s129
    %s131 = sphi 0, %s129
    %s132 = sphi 0, %s131
    %s146 = sphi 0, %s132
  $region4: #{axial_attn_forward.5} parent=0 // loop_header_branch
    %14 = sbr.rel (%p12) target = $region8
  $region5: #{axial_attn_forward.5} parent=0 // loop_body
    %s16 = ssub.s32 %s11, 1
    %s17 = ssub.s32 %s11, 2
    %s18 = sadd.s32 %s11, 1
    %s19 = ssub.s32 %s11, %s18
    %p20 = scmp.eq.s32.totalorder %s19, 0
    %s22 = sadd.s32 %s21, 1
    %s23 = scalar_select %p20, %s21, %s22
    %p26 = pneg %p20
    %p27 = scmp.eq.s32.totalorder %s11, 31
    %p28 = por %p26, %p27
    %p29 = scmp.ne.s32.totalorder %s21, %s24
    %p30 = scmp.eq.s32.totalorder %s11, 0
    %p31 = por %p29, %p30
    %p32 = scmp.ne.s32.totalorder %s21, %s24
    %p33 = scmp.eq.s32.totalorder %s16, 31
    %p34 = por %p32, %p33
    %p35 = scmp.ne.s32.totalorder %s24, %s25
    %p36 = scmp.eq.s32.totalorder %s16, 0
    %p37 = por %p35, %p36
    %p38 = scmp.ne.s32.totalorder %s24, %s25
    %p39 = scmp.eq.s32.totalorder %s17, 31
    %p40 = por %p38, %p39
    %p42 = scmp.ne.s32.totalorder %s25, %s41
    %p43 = scmp.eq.s32.totalorder %s17, 0
    %p44 = por %p42, %p43
    %s46 = sadd.s32 %s45, 1
    %p49 = scmp.eq.s32.totalorder %s11, 31
    %p50 = scmp.ne.s32.totalorder %s45, %s47
    %p51 = scmp.eq.s32.totalorder %s11, 0
    %p52 = por %p50, %p51
    %p53 = scmp.ne.s32.totalorder %s45, %s47
    %p54 = scmp.eq.s32.totalorder %s16, 31
    %p55 = por %p53, %p54
    %p56 = scmp.ne.s32.totalorder %s47, %s48
    %p57 = scmp.eq.s32.totalorder %s16, 0
    %p58 = por %p56, %p57
    %p59 = scmp.ne.s32.totalorder %s47, %s48
    %p60 = scmp.eq.s32.totalorder %s17, 31
    %p61 = por %p59, %p60
    %p63 = scmp.ne.s32.totalorder %s48, %s62
    %p64 = scmp.eq.s32.totalorder %s17, 0
    %p65 = por %p63, %p64
    %s67 = sadd.s32 %s66, 1
    %p70 = scmp.eq.s32.totalorder %s11, 31
    %p71 = scmp.ne.s32.totalorder %s66, %s68
    %p72 = scmp.eq.s32.totalorder %s11, 0
    %p73 = por %p71, %p72
    %p74 = scmp.ne.s32.totalorder %s66, %s68
    %p75 = scmp.eq.s32.totalorder %s16, 31
    %p76 = por %p74, %p75
    %p77 = scmp.ne.s32.totalorder %s68, %s69
    %p78 = scmp.eq.s32.totalorder %s16, 0
    %p79 = por %p77, %p78
    %p80 = scmp.ne.s32.totalorder %s68, %s69
    %p81 = scmp.eq.s32.totalorder %s17, 31
    %p82 = por %p80, %p81
    %p84 = scmp.ne.s32.totalorder %s69, %s83
    %p85 = scmp.eq.s32.totalorder %s17, 0
    %p86 = por %p84, %p85
    %s88 = sadd.s32 %s87, 1
    %p91 = scmp.eq.s32.totalorder %s11, 31
    %p92 = scmp.ne.s32.totalorder %s87, %s89
    %p93 = scmp.eq.s32.totalorder %s11, 0
    %p94 = por %p92, %p93
    %p95 = scmp.ne.s32.totalorder %s87, %s89
    %p96 = scmp.eq.s32.totalorder %s16, 31
    %p97 = por %p95, %p96
    %p98 = scmp.ne.s32.totalorder %s89, %s90
    %p99 = scmp.eq.s32.totalorder %s16, 0
    %p100 = por %p98, %p99
    %p101 = scmp.ne.s32.totalorder %s89, %s90
    %p102 = scmp.eq.s32.totalorder %s17, 31
    %p103 = por %p101, %p102
    %p105 = scmp.ne.s32.totalorder %s90, %s104
    %p106 = scmp.eq.s32.totalorder %s17, 0
    %p107 = por %p105, %p106
    %s109 = sadd.s32 %s108, 1
    %p112 = scmp.eq.s32.totalorder %s11, 31
    %p113 = scmp.ne.s32.totalorder %s108, %s110
    %p114 = scmp.eq.s32.totalorder %s11, 0
    %p115 = por %p113, %p114
    %p116 = scmp.ne.s32.totalorder %s108, %s110
    %p117 = scmp.eq.s32.totalorder %s16, 31
    %p118 = por %p116, %p117
    %p119 = scmp.ne.s32.totalorder %s110, %s111
    %p120 = scmp.eq.s32.totalorder %s16, 0
    %p121 = por %p119, %p120
    %p122 = scmp.ne.s32.totalorder %s110, %s111
    %p123 = scmp.eq.s32.totalorder %s17, 31
    %p124 = por %p122, %p123
    %p126 = scmp.ne.s32.totalorder %s111, %s125
    %p127 = scmp.eq.s32.totalorder %s17, 0
    %p128 = por %p126, %p127
    %s130 = sadd.s32 %s129, 1
    %p133 = scmp.eq.s32.totalorder %s11, 31
    %p134 = scmp.ne.s32.totalorder %s129, %s131
    %p135 = scmp.eq.s32.totalorder %s11, 0
    %p136 = por %p134, %p135
    %p137 = scmp.ne.s32.totalorder %s129, %s131
    %p138 = scmp.eq.s32.totalorder %s16, 31
    %p139 = por %p137, %p138
    %p140 = scmp.ne.s32.totalorder %s131, %s132
    %p141 = scmp.eq.s32.totalorder %s16, 0
    %p142 = por %p140, %p141
    %p143 = scmp.ne.s32.totalorder %s131, %s132
    %p144 = scmp.eq.s32.totalorder %s17, 31
    %p145 = por %p143, %p144
    %p147 = scmp.ne.s32.totalorder %s132, %s146
    %p148 = scmp.eq.s32.totalorder %s17, 0
    %p149 = por %p147, %p148
    %p150 = scmp.le.s32.totalorder 1, %s11
    %p151 = scmp.lt.s32.totalorder %s11, 33
    %p152 = pnand %p150, %p151
    %p153 = pneg %p152
    // Predicated region
    $region9: #{axial_attn_forward.5} parent=5 // pred_check
      _
    $region10: #{axial_attn_forward.5} parent=5 // pred_check_branch
      %155 = sbr.rel (%p152) target = $region12
    $region11: #{axial_attn_forward.5} parent=5 // pred_region
      %s156 = ssub.s32 %s11, 1
      // Predicated region
      $region13: #{axial_attn_forward.5} parent=11 // pred_check
        %p157 = pneg %p58
      $region14: #{axial_attn_forward.5} parent=11 // pred_check_branch
        %159 = sbr.rel (%p157) target = $region16
      $region15: #{axial_attn_forward.5} parent=11 // pred_region
        _
      $region16: #{axial_attn_forward.5} parent=11 // pred_fallthru
        _
      // Predicated region
      $region17: #{axial_attn_forward.5} parent=11 // pred_check
        %p160 = pneg %p79
      $region18: #{axial_attn_forward.5} parent=11 // pred_check_branch
        %162 = sbr.rel (%p160) target = $region20
      $region19: #{axial_attn_forward.5} parent=11 // pred_region
        _
      $region20: #{axial_attn_forward.5} parent=11 // pred_fallthru
        _
      // Predicated region
      $region21: #{axial_attn_forward.5} parent=11 // pred_check
        %p163 = pneg %p100
      $region22: #{axial_attn_forward.5} parent=11 // pred_check_branch
        %165 = sbr.rel (%p163) target = $region24
      $region23: #{axial_attn_forward.5} parent=11 // pred_region
        _
      $region24: #{axial_attn_forward.5} parent=11 // pred_fallthru
        _
      // Predicated region
      $region25: #{axial_attn_forward.5} parent=11 // pred_check
        %p166 = pneg %p121
      $region26: #{axial_attn_forward.5} parent=11 // pred_check_branch
        %168 = sbr.rel (%p166) target = $region28
      $region27: #{axial_attn_forward.5} parent=11 // pred_region
        _
      $region28: #{axial_attn_forward.5} parent=11 // pred_fallthru
        _
    $region12: #{axial_attn_forward.5} parent=5 // pred_fallthru
      _
    %p169 = scmp.lt.s32.totalorder %s11, 32
    // Predicated region
    $region29: #{axial_attn_forward.5} parent=5 // pred_check
      %p170 = pneg %p169
    $region30: #{axial_attn_forward.5} parent=5 // pred_check_branch
      %172 = sbr.rel (%p170) target = $region32
    $region31: #{axial_attn_forward.5} parent=5 // pred_region
      // Predicated region
      $region33: #{axial_attn_forward.5} parent=31 // pred_check
        %p173 = pneg %p31
      $region34: #{axial_attn_forward.5} parent=31 // pred_check_branch
        %175 = sbr.rel (%p173) target = $region36
      $region35: #{axial_attn_forward.5} parent=31 // pred_region
        %p176 = scmp.lt.s32.totalorder %s11, 31
        %s177 = scalar_select %p176, %s11, 31
        %s178 = smul.addr %s177, 8
        %s179 = scalar_lea.vmem %s0, %s178
      $region36: #{axial_attn_forward.5} parent=31 // pred_fallthru
        _
    $region32: #{axial_attn_forward.5} parent=5 // pred_fallthru
      _
    %p180 = scmp.le.s32.totalorder 1, %s11
    %p181 = scmp.lt.s32.totalorder %s11, 33
    %p182 = pnand %p180, %p181
    %p183 = pneg %p182
    // Predicated region
    $region37: #{axial_attn_forward.5} parent=5 // pred_check
      _
    $region38: #{axial_attn_forward.5} parent=5 // pred_check_branch
      %185 = sbr.rel (%p182) target = $region40
    $region39: #{axial_attn_forward.5} parent=5 // pred_region
      %s186 = ssub.s32 %s11, 1
      %p187 = scmp.lt.s32.totalorder %s16, 31
      %s188 = scalar_select %p187, %s16, 31
      %s189 = smul.addr %s188, 8
      %s190 = scalar_lea.vmem %s0, %s189
      %p191 = pneg %p37
      %p192 = pneg %p34
      %p193 = pneg %p58
      %p194 = pneg %p55
      %p195 = pneg %p79
      %p196 = pneg %p76
      %p197 = pneg %p100
      %p198 = pneg %p97
      %p199 = pneg %p121
      %p200 = pneg %p118
      %p201 = pneg %p142
      %p202 = pneg %p139
      %p203 = scmp.lt.s32.totalorder %s16, 31
      %s204 = scalar_select %p203, %s16, 31
      %s205 = smul.addr %s204, 8
      %s206 = scalar_lea.vmem %s0, %s205
      %p207 = scmp.eq.s32.totalorder %s16, 0
      // Predicated region
      $region41: #{axial_attn_forward.5} parent=39 // pred_check
        %p208 = pneg %p207
      $region42: #{axial_attn_forward.5} parent=39 // pred_check_branch
        %210 = sbr.rel (%p208) target = $region44
      $region43: #{axial_attn_forward.5} parent=39 // pred_region
        %vm211 = vcmask 130048
        %212 = vst.msk [vmem:[%s5] sm:$0xff] %vm211, 0.0
        %vm213 = vcmask 125952
        %214 = vst.msk [vmem:[%s5 + $0x8] sm:$0xf] %vm213, 0.0
      $region44: #{axial_attn_forward.5} parent=39 // pred_fallthru
        _
      %v215 = vld [vmem:[%s206] sm:$0xff]
      %v216 = vld [vmem:[%s1] sm:$0xff]
      %v217 = vld [vmem:[%s1 + $0x8] sm:$0xff]
      %v218 = vld [vmem:[%s2] sm:$0xff]
      %v219 = vld [vmem:[%s2 + $0x8] sm:$0xff]
      %221 = vset.pattern.permute.xlu0 0
      %222 = vperm.xlu0 %221, %v218
      %v223 = vpop.permute.xlu0 %222
      %226 = vset.pattern.permute.xlu0 0
      %227 = vperm.xlu0 %226, %v219
      %v228 = vpop.permute.xlu0 %227
      %vm230 = vcmask 64512
      %v232 = vsel %vm230, %v216, 0
      %v235 = vsel %vm230, %v217, 0
      %237 = vmatprep.subr.mxu0 0.0
      %238 = vmatpush1.msra.mxu0 %v215
      %239 = vmatprep.subr.mxu0 0.0
      %240 = vmatpush1.msra.mxu0 0.0
      %241 = vmatprep.subr.mxu0 0.0
      %242 = vmatpush1.msra.mxu0 0.0
      %243 = vmatprep.subr.mxu0 0.0
      %244 = vmatpush1.msra.mxu0 0.0
      %245 = vmatprep.subr.mxu0 0.0
      %246 = vmatpush1.msra.mxu0 0.0
      %247 = vmatprep.subr.mxu0 0.0
      %248 = vmatpush1.msra.mxu0 0.0
      %249 = vmatprep.subr.mxu0 0.0
      %250 = vmatpush1.msra.mxu0 0.0
      %251 = vmatprep.subr.mxu0 0.0
      %252 = vmatpush1.msra.mxu0 0.0
      %253 = vmatprep.subr.mxu0 0.0
      %254 = vmatpush1.msra.mxu0 0.0
      %255 = vmatprep.subr.mxu0 0.0
      %256 = vmatpush1.msra.mxu0 0.0
      %257 = vmatprep.subr.mxu0 0.0
      %258 = vmatpush1.msra.mxu0 0.0
      %259 = vmatprep.subr.mxu0 0.0
      %260 = vmatpush1.msra.mxu0 0.0
      %261 = vmatprep.subr.mxu0 0.0
      %262 = vmatpush1.msra.mxu0 0.0
      %263 = vmatprep.subr.mxu0 0.0
      %264 = vmatpush1.msra.mxu0 0.0
      %265 = vmatprep.subr.mxu0 0.0
      %266 = vmatpush1.msra.mxu0 0.0
      %267 = vmatprep.subr.mxu0 0.0
      %268 = vmatpush1.msra.mxu0 0.0
      %269 = vmatprep.subr.mxu0 0.0
      %270 = vmatpush1.msra.mxu0 0.0
      %271 = vmatprep.subr.mxu0 0.0
      %272 = vmatpush1.msra.mxu0 0.0
      %273 = vmatprep.subr.mxu0 0.0
      %274 = vmatpush1.msra.mxu0 0.0
      %275 = vmatprep.subr.mxu0 0.0
      %276 = vmatpush1.msra.mxu0 0.0
      %277 = vmatprep.subr.mxu0 0.0
      %278 = vmatpush1.msra.mxu0 0.0
      %279 = vmatprep.subr.mxu0 0.0
      %280 = vmatpush1.msra.mxu0 0.0
      %281 = vmatprep.subr.mxu0 0.0
      %282 = vmatpush1.msra.mxu0 0.0
      %283 = vmatprep.subr.mxu0 0.0
      %284 = vmatpush1.msra.mxu0 0.0
      %285 = vmatprep.subr.mxu0 0.0
      %286 = vmatpush1.msra.mxu0 0.0
      %287 = vmatprep.subr.mxu0 0.0
      %288 = vmatpush1.msra.mxu0 0.0
      %289 = vmatprep.subr.mxu0 0.0
      %290 = vmatpush1.msra.mxu0 0.0
      %291 = vmatprep.subr.mxu0 0.0
      %292 = vmatpush1.msra.mxu0 0.0
      %293 = vmatprep.subr.mxu0 0.0
      %294 = vmatpush1.msra.mxu0 0.0
      %295 = vmatprep.subr.mxu0 0.0
      %296 = vmatpush1.msra.mxu0 0.0
      %297 = vmatprep.subr.mxu0 0.0
      %298 = vmatpush1.msra.mxu0 0.0
      %299 = vmatprep.subr.mxu0 0.0
      %300 = vmatpush1.msra.mxu0 0.0
      %301 = vmatprep.mubr.f32.mxu0 0.0
      %302 = vmatmul.mubr.f32.gmra.mrb[0].mxu0 %v232
      %v303 = vpop.f32.mrb[0].mxu0
      %v304 = vadd.f32 %v223, %v303
      %v305 = vpop.f32.mrb[0].mxu0
      %306 = vmatprep.mubr.f32.mxu0 0.0
      %307 = vmatmul.mubr.f32.gmra.mrb[0].mxu0 %v235
      %v308 = vpop.f32.mrb[0].mxu0
      %v309 = vadd.f32 %v228, %v308
      %v310 = vpop.f32.mrb[0].mxu0
      %311 = vdwg.mxu0
      %v312 = vlaneseq
      %v313 = vshrl.u32 %v312, 7
      %v314 = vsub.s32 0, %v313
      %v315 = vrot.slane %v304, %v314
      %317 = vbcast.lane.b32.xlu0 %v315, 256
      %v318 = vpop.permute.xlu0 %317
      %s320 = sor.u32 256, 8
      %321 = vbcast.lane.b32.xlu0 %v315, %s320
      %v322 = vpop.permute.xlu0 %321
      %v323 = vlaneseq
      %v324 = vshrl.u32 %v323, 7
      %v325 = vsub.s32 1, %v324
      %v326 = vrot.slane %v304, %v325
      %328 = vbcast.lane.b32.xlu0 %v326, 256
      %v329 = vpop.permute.xlu0 %328
      %s331 = sor.u32 256, 8
      %332 = vbcast.lane.b32.xlu0 %v326, %s331
      %v333 = vpop.permute.xlu0 %332
      %v336 = vunpack.c.l.s4 1966171168
      %v337 = vunpack.c.0.s8 %v336
      %v338 = vlaneseq
      %v339 = vshrl.u32 %v338, 7
      %v340 = vsub.s32 %v337, %v339
      %v341 = vrot.slane %v304, %v340
      %v342 = vcombine.high %v341, %v341
      %v344 = vunpack.c.l.s4 1966171168
      %v345 = vunpack.c.0.s8 %v344
      %v346 = vlaneseq
      %v347 = vshrl.u32 %v346, 7
      %v348 = vsub.s32 %v345, %v347
      %v349 = vrot.slane %v341, %v348
      %v351 = vunpack.c.l.s4 1966171168
      %v352 = vunpack.c.0.s8 %v351
      %v353 = vlaneseq
      %v354 = vshrl.u32 %v353, 7
      %v355 = vsub.s32 %v352, %v354
      %v356 = vrot.slane %v342, %v355
      %v357 = vcombine.high %v349, %v349
      %v358 = vcombine.high %v356, %v356
      %v359 = vlaneseq
      %v360 = vshrl.u32 %v359, 7
      %v361 = vsub.s32 0, %v360
      %v362 = vrot.slane %v357, %v361
      %v363 = vlaneseq
      %v364 = vshrl.u32 %v363, 7
      %v365 = vsub.s32 0, %v364
      %v366 = vrot.slane %v358, %v365
      %v369 = vmul.f32 %v318, %v362
      %v370 = vmul.f32 %v322, %v362
      %v371 = vmul.f32 %v329, %v366
      %v372 = vmul.f32 %v333, %v366
      %vm373 = vcmask 130048
      %v374 = vsel %vm373, %v369, 0.0
      %v375 = vsel %vm373, %v371, 0.0
      %v376 = vadd.f32 %v374, %v375
      %v377 = vsel %vm373, %v370, 0.0
      %v378 = vsel %vm373, %v372, 0.0
      %v379 = vadd.f32 %v377, %v378
      %v380 = vld [vmem:[%s3] sm:$0xff]
      %v381 = vld [vmem:[%s3 + $0x8] sm:$0xff]
      %v382 = vld [vmem:[%s3 + $0x10] sm:$0xff]
      %v383 = vld [vmem:[%s3 + $0x18] sm:$0xff]
      %v384 = vmul.f32 %v318, %v380
      %v385 = vmul.f32 %v322, %v381
      %v386 = vmul.f32 %v329, %v382
      %v387 = vmul.f32 %v333, %v383
      %v388 = vsel %vm373, %v384, 0.0
      %v389 = vsel %vm373, %v386, 0.0
      %v390 = vadd.f32 %v388, %v389
      %v391 = vsel %vm373, %v385, 0.0
      %v392 = vsel %vm373, %v387, 0.0
      %v393 = vadd.f32 %v391, %v392
      %v394 = vld [vmem:[%s4] sm:$0xff]
      %v395 = vld [vmem:[%s4 + $0x8] sm:$0xff]
      %v396 = vld [vmem:[%s4 + $0x10] sm:$0xff]
      %v397 = vld [vmem:[%s4 + $0x18] sm:$0xff]
      %v398 = vlaneseq
      %v399 = vshrl.u32 %v398, 7
      %v400 = vsub.s32 2, %v399
      %v401 = vrot.slane %v304, %v400
      %403 = vbcast.lane.b32.xlu0 %v401, 256
      %v404 = vpop.permute.xlu0 %403
      %s406 = sor.u32 256, 8
      %407 = vbcast.lane.b32.xlu0 %v401, %s406
      %v408 = vpop.permute.xlu0 %407
      %v409 = vlaneseq
      %v410 = vshrl.u32 %v409, 7
      %v411 = vsub.s32 3, %v410
      %v412 = vrot.slane %v304, %v411
      %414 = vbcast.lane.b32.xlu0 %v412, 256
      %v415 = vpop.permute.xlu0 %414
      %s417 = sor.u32 256, 8
      %418 = vbcast.lane.b32.xlu0 %v412, %s417
      %v419 = vpop.permute.xlu0 %418
      %v420 = vmul.f32 %v404, %v394
      %v421 = vmul.f32 %v408, %v395
      %v422 = vmul.f32 %v415, %v396
      %v423 = vmul.f32 %v419, %v397
      %v424 = vsel %vm373, %v420, 0.0
      %v425 = vsel %vm373, %v422, 0.0
      %v426 = vadd.f32 %v424, %v425
      %v427 = vsel %vm373, %v421, 0.0
      %v428 = vsel %vm373, %v423, 0.0
      %v429 = vadd.f32 %v427, %v428
      %v430 = vsel %vm373, %v376, 0.0
      %v431 = vsel %vm373, %v379, 0.0
      %v432 = vadd.f32 %v430, %v431
      %v433 = vrot.slane %v432, 4
      %v434 = vadd.f32 %v432, %v433
      %v435 = vrot.slane %v434, 2
      %v436 = vadd.f32 %v434, %v435
      %v437 = vrot.slane %v436, 1
      %v438 = vadd.f32 %v436, %v437
      %v439 = vsel %vm373, %v390, 0.0
      %v440 = vsel %vm373, %v393, 0.0
      %v441 = vadd.f32 %v439, %v440
      %v442 = vrot.slane %v441, 4
      %v443 = vadd.f32 %v441, %v442
      %v444 = vrot.slane %v443, 2
      %v445 = vadd.f32 %v443, %v444
      %v446 = vrot.slane %v445, 1
      %v447 = vadd.f32 %v445, %v446
      %v448 = vsel %vm373, %v426, 0.0
      %v449 = vsel %vm373, %v429, 0.0
      %v450 = vadd.f32 %v448, %v449
      %v451 = vrot.slane %v450, 4
      %v452 = vadd.f32 %v450, %v451
      %v453 = vrot.slane %v452, 2
      %v454 = vadd.f32 %v452, %v453
      %v455 = vrot.slane %v454, 1
      %v456 = vadd.f32 %v454, %v455
      %v457 = vmul.f32 %v376, %v376
      %v458 = vmul.f32 %v379, %v379
      %v459 = vsel %vm373, %v457, 0.0
      %v460 = vsel %vm373, %v458, 0.0
      %v461 = vadd.f32 %v459, %v460
      %v462 = vrot.slane %v461, 4
      %v463 = vadd.f32 %v461, %v462
      %v464 = vrot.slane %v463, 2
      %v465 = vadd.f32 %v463, %v464
      %v466 = vrot.slane %v465, 1
      %v467 = vadd.f32 %v465, %v466
      %v468 = vmul.f32 %v390, %v390
      %v469 = vmul.f32 %v393, %v393
      %v470 = vsel %vm373, %v468, 0.0
      %v471 = vsel %vm373, %v469, 0.0
      %v472 = vadd.f32 %v470, %v471
      %v473 = vrot.slane %v472, 4
      %v474 = vadd.f32 %v472, %v473
      %v475 = vrot.slane %v474, 2
      %v476 = vadd.f32 %v474, %v475
      %v477 = vrot.slane %v476, 1
      %v478 = vadd.f32 %v476, %v477
      %v479 = vmul.f32 %v426, %v426
      %v480 = vmul.f32 %v429, %v429
      %v481 = vsel %vm373, %v479, 0.0
      %v482 = vsel %vm373, %v480, 0.0
      %v483 = vadd.f32 %v481, %v482
      %v484 = vrot.slane %v483, 4
      %v485 = vadd.f32 %v483, %v484
      %v486 = vrot.slane %v485, 2
      %v487 = vadd.f32 %v485, %v486
      %v488 = vrot.slane %v487, 1
      %v489 = vadd.f32 %v487, %v488
      %v490 = vlaneseq
      %v491 = vshrl.u32 %v490, 7
      %v492 = vsub.s32 0, %v491
      %v493 = vrot.slane %v309, %v492
      %495 = vbcast.lane.b32.xlu0 %v493, 256
      %v496 = vpop.permute.xlu0 %495
      %s498 = sor.u32 256, 8
      %499 = vbcast.lane.b32.xlu0 %v493, %s498
      %v500 = vpop.permute.xlu0 %499
      %v501 = vlaneseq
      %v502 = vshrl.u32 %v501, 7
      %v503 = vsub.s32 1, %v502
      %v504 = vrot.slane %v309, %v503
      %506 = vbcast.lane.b32.xlu0 %v504, 256
      %v507 = vpop.permute.xlu0 %506
      %s509 = sor.u32 256, 8
      %510 = vbcast.lane.b32.xlu0 %v504, %s509
      %v511 = vpop.permute.xlu0 %510
      %v514 = vunpack.c.l.s4 1966171168
      %v515 = vunpack.c.0.s8 %v514
      %v516 = vlaneseq
      %v517 = vshrl.u32 %v516, 7
      %v518 = vsub.s32 %v515, %v517
      %v519 = vrot.slane %v309, %v518
      %v520 = vcombine.high %v519, %v519
      %v522 = vunpack.c.l.s4 1966171168
      %v523 = vunpack.c.0.s8 %v522
      %v524 = vlaneseq
      %v525 = vshrl.u32 %v524, 7
      %v526 = vsub.s32 %v523, %v525
      %v527 = vrot.slane %v519, %v526
      %v529 = vunpack.c.l.s4 1966171168
      %v530 = vunpack.c.0.s8 %v529
      %v531 = vlaneseq
      %v532 = vshrl.u32 %v531, 7
      %v533 = vsub.s32 %v530, %v532
      %v534 = vrot.slane %v520, %v533
      %v535 = vcombine.high %v527, %v527
      %v536 = vcombine.high %v534, %v534
      %v537 = vlaneseq
      %v538 = vshrl.u32 %v537, 7
      %v539 = vsub.s32 0, %v538
      %v540 = vrot.slane %v535, %v539
      %v541 = vlaneseq
      %v542 = vshrl.u32 %v541, 7
      %v543 = vsub.s32 0, %v542
      %v544 = vrot.slane %v536, %v543
      %v547 = vmul.f32 %v496, %v540
      %v548 = vmul.f32 %v500, %v540
      %v549 = vmul.f32 %v507, %v544
      %v550 = vmul.f32 %v511, %v544
      %v551 = vsel %vm373, %v547, 0.0
      %v552 = vsel %vm373, %v549, 0.0
      %v553 = vadd.f32 %v551, %v552
      %v554 = vsel %vm373, %v548, 0.0
      %v555 = vsel %vm373, %v550, 0.0
      %v556 = vadd.f32 %v554, %v555
      %v557 = vmul.f32 %v496, %v380
      %v558 = vmul.f32 %v500, %v381
      %v559 = vmul.f32 %v507, %v382
      %v560 = vmul.f32 %v511, %v383
      %v561 = vsel %vm373, %v557, 0.0
      %v562 = vsel %vm373, %v559, 0.0
      %v563 = vadd.f32 %v561, %v562
      %v564 = vsel %vm373, %v558, 0.0
      %v565 = vsel %vm373, %v560, 0.0
      %v566 = vadd.f32 %v564, %v565
      %v567 = vlaneseq
      %v568 = vshrl.u32 %v567, 7
      %v569 = vsub.s32 2, %v568
      %v570 = vrot.slane %v309, %v569
      %572 = vbcast.lane.b32.xlu0 %v570, 256
      %v573 = vpop.permute.xlu0 %572
      %s575 = sor.u32 256, 8
      %576 = vbcast.lane.b32.xlu0 %v570, %s575
      %v577 = vpop.permute.xlu0 %576
      %v578 = vlaneseq
      %v579 = vshrl.u32 %v578, 7
      %v580 = vsub.s32 3, %v579
      %v581 = vrot.slane %v309, %v580
      %583 = vbcast.lane.b32.xlu0 %v581, 256
      %v584 = vpop.permute.xlu0 %583
      %s586 = sor.u32 256, 8
      %587 = vbcast.lane.b32.xlu0 %v581, %s586
      %v588 = vpop.permute.xlu0 %587
      %v589 = vmul.f32 %v573, %v394
      %v590 = vmul.f32 %v577, %v395
      %v591 = vmul.f32 %v584, %v396
      %v592 = vmul.f32 %v588, %v397
      %v593 = vsel %vm373, %v589, 0.0
      %v594 = vsel %vm373, %v591, 0.0
      %v595 = vadd.f32 %v593, %v594
      %v596 = vsel %vm373, %v590, 0.0
      %v597 = vsel %vm373, %v592, 0.0
      %v598 = vadd.f32 %v596, %v597
      %v599 = vsel %vm373, %v553, 0.0
      %v600 = vsel %vm373, %v556, 0.0
      %v601 = vadd.f32 %v599, %v600
      %v602 = vrot.slane %v601, 4
      %v603 = vadd.f32 %v601, %v602
      %v604 = vrot.slane %v603, 2
      %v605 = vadd.f32 %v603, %v604
      %v606 = vrot.slane %v605, 1
      %v607 = vadd.f32 %v605, %v606
      %v608 = vsel %vm373, %v563, 0.0
      %v609 = vsel %vm373, %v566, 0.0
      %v610 = vadd.f32 %v608, %v609
      %v611 = vrot.slane %v610, 4
      %v612 = vadd.f32 %v610, %v611
      %v613 = vrot.slane %v612, 2
      %v614 = vadd.f32 %v612, %v613
      %v615 = vrot.slane %v614, 1
      %v616 = vadd.f32 %v614, %v615
      %v617 = vsel %vm373, %v595, 0.0
      %v618 = vsel %vm373, %v598, 0.0
      %v619 = vadd.f32 %v617, %v618
      %v620 = vrot.slane %v619, 4
      %v621 = vadd.f32 %v619, %v620
      %v622 = vrot.slane %v621, 2
      %v623 = vadd.f32 %v621, %v622
      %v624 = vrot.slane %v623, 1
      %v625 = vadd.f32 %v623, %v624
      %v626 = vmul.f32 %v553, %v553
      %v627 = vmul.f32 %v556, %v556
      %v628 = vsel %vm373, %v626, 0.0
      %v629 = vsel %vm373, %v627, 0.0
      %v630 = vadd.f32 %v628, %v629
      %v631 = vrot.slane %v630, 4
      %v632 = vadd.f32 %v630, %v631
      %v633 = vrot.slane %v632, 2
      %v634 = vadd.f32 %v632, %v633
      %v635 = vrot.slane %v634, 1
      %v636 = vadd.f32 %v634, %v635
      %v637 = vmul.f32 %v563, %v563
      %v638 = vmul.f32 %v566, %v566
      %v639 = vsel %vm373, %v637, 0.0
      %v640 = vsel %vm373, %v638, 0.0
      %v641 = vadd.f32 %v639, %v640
      %v642 = vrot.slane %v641, 4
      %v643 = vadd.f32 %v641, %v642
      %v644 = vrot.slane %v643, 2
      %v645 = vadd.f32 %v643, %v644
      %v646 = vrot.slane %v645, 1
      %v647 = vadd.f32 %v645, %v646
      %v648 = vmul.f32 %v595, %v595
      %v649 = vmul.f32 %v598, %v598
      %v650 = vsel %vm373, %v648, 0.0
      %v651 = vsel %vm373, %v649, 0.0
      %v652 = vadd.f32 %v650, %v651
      %v653 = vrot.slane %v652, 4
      %v654 = vadd.f32 %v652, %v653
      %v655 = vrot.slane %v654, 2
      %v656 = vadd.f32 %v654, %v655
      %v657 = vrot.slane %v656, 1
      %v658 = vadd.f32 %v656, %v657
      %vm659 = vcmask 1040384
      %v660 = vsel %vm659, %v438, %v607
      %vm661 = vcmask 1041408
      %v662 = vsel %vm661, %v660, %v447
      %vm663 = vcmask 1042432
      %v664 = vsel %vm663, %v662, %v616
      %vm665 = vcmask 1043456
      %v666 = vsel %vm665, %v664, %v456
      %vm667 = vcmask 1044480
      %v668 = vsel %vm667, %v666, %v625
      %vm669 = vcmask 1045504
      %v670 = vsel %vm669, %v668, %v467
      %vm671 = vcmask 1046528
      %v672 = vsel %vm671, %v670, %v636
      %v673 = vsel %vm659, %v478, %v647
      %v674 = vsel %vm661, %v673, %v489
      %v675 = vsel %vm663, %v674, %v658
      %v676 = vld [vmem:[%s5] sm:$0xff]
      %v677 = vld [vmem:[%s5 + $0x8] sm:$0xf]
      %v678 = vadd.f32 %v676, %v672
      %v679 = vadd.f32 %v677, %v675
      %680 = vst.msk [vmem:[%s5] sm:$0xff] %vm373, %v678
      %vm681 = vcmask 125952
      %682 = vst.msk [vmem:[%s5 + $0x8] sm:$0xf] %vm681, %v679
      // Predicated region
      $region45: #{axial_attn_forward.5} parent=39 // pred_check
        %p683 = pneg %p139
      $region46: #{axial_attn_forward.5} parent=39 // pred_check_branch
        %685 = sbr.rel (%p683) target = $region48
      $region47: #{axial_attn_forward.5} parent=39 // pred_region
        _
      $region48: #{axial_attn_forward.5} parent=39 // pred_fallthru
        _
      // Predicated region
      $region49: #{axial_attn_forward.5} parent=39 // pred_check
        %p686 = pneg %p139
      $region50: #{axial_attn_forward.5} parent=39 // pred_check_branch
        %688 = sbr.rel (%p686) target = $region52
      $region51: #{axial_attn_forward.5} parent=39 // pred_region
        _
      $region52: #{axial_attn_forward.5} parent=39 // pred_fallthru
        _
    $region40: #{axial_attn_forward.5} parent=5 // pred_fallthru
      _
    %p689 = scmp.le.s32.totalorder 2, %s11
    // Predicated region
    $region53: #{axial_attn_forward.5} parent=5 // pred_check
      %p690 = pneg %p689
    $region54: #{axial_attn_forward.5} parent=5 // pred_check_branch
      %692 = sbr.rel (%p690) target = $region56
    $region55: #{axial_attn_forward.5} parent=5 // pred_region
      %s693 = ssub.s32 %s11, 2
    $region56: #{axial_attn_forward.5} parent=5 // pred_fallthru
      _
  $region6: #{axial_attn_forward.5} parent=0 // loop_footer
    %s15 = sadd.s32 1, %s11
  $region7: #{axial_attn_forward.5} parent=0 // loop_footer_branch
    %10 = sbr.rel target = $region3
  $region8: #{axial_attn_forward.5} parent=0 // loop_exit
    _

// kernel: axial_attn_forward.6
$region0: #{axial_attn_forward.6}
  #allocation0 [shape = 'u32[]', space=smem, size = 0x4, offset = 0x4, fixed_abs, tag = 'smem constant byte address 0x4 - core index']
  #allocation1 [shape = 'u32[144,128]{1,0:T(1,128)}', space=vmem, size = 0x12000, scoped, tag = 'internal scratch']
  %s0 = inlined_call_operand.vmem [shape: f32[32,8,16], index: 0, kind: input, shape index: {}]
  %s1 = inlined_call_operand.vmem [shape: f32[16,8], index: 1, kind: input, shape index: {}]
  %s2 = inlined_call_operand.vmem [shape: f32[16,1], index: 2, kind: input, shape index: {}]
  %s3 = inlined_call_operand.vmem [shape: f32[2,16,16], index: 3, kind: input, shape index: {}]
  %s4 = inlined_call_operand.vmem [shape: f32[2,16,16], index: 4, kind: input, shape index: {}]
  %s5 = inlined_call_operand.vmem [shape: f32[4,16,16], index: 5, kind: input, shape index: {}]
  %s6 = inlined_call_operand.vmem [shape: f32[2,6], index: 6, kind: input, shape index: {}]
  %s7 = inlined_call_operand.vmem [shape: f32[32,8,16], index: 7, kind: output, shape index: {0}]
  %s8 = inlined_call_operand.vmem [shape: f32[32,8,16], index: 8, kind: output, shape index: {1}]
  %9 = xla_tuple %s7, %s8
  %s10 = sld [smem:[#allocation0]]
  $region73: #{axial_attn_forward.6} parent=0
    _
  %s12 = ssub.s32 1, %s10
  %s13 = scalar_select 0, %s12, %s10
  $region1: #{axial_attn_forward.6} parent=0
    #allocation2 [shape = 'u8[1024]{0}', space=smem, size = 0x400, scoped, tag = 'input window, operand 6, single buffered']
    #allocation3 [shape = 's32[2]{0}', space=sflag, size = 0x8, scoped, tag = 'scoped memory for axial_attn_forward.6']
    %14 = vsyncpa [#allocation3], 0
    loop: start=0, step=1, limit=34
    $region2: #{axial_attn_forward.6} parent=1 // loop_pre_header
      _
    $region3: #{axial_attn_forward.6} parent=1 // loop_header
      %s16 = sphi 0, %s20
      %p17 = scmp.ge.s32.totalorder %s16, 34
      %s26 = sphi 0, %s28
      %s29 = sphi 0, %s26
      %s30 = sphi 0, %s29
      %s46 = sphi 0, %s30
      %s50 = sphi 0, %s50
      %s52 = sphi 0, %s50
      %s53 = sphi 0, %s52
      %s67 = sphi 0, %s53
      %s71 = sphi 0, %s71
      %s73 = sphi 0, %s71
      %s74 = sphi 0, %s73
      %s88 = sphi 0, %s74
      %s92 = sphi 0, %s92
      %s94 = sphi 0, %s92
      %s95 = sphi 0, %s94
      %s109 = sphi 0, %s95
      %s113 = sphi 0, %s113
      %s115 = sphi 0, %s113
      %s116 = sphi 0, %s115
      %s130 = sphi 0, %s116
      %s134 = sphi 0, %s134
      %s136 = sphi 0, %s134
      %s137 = sphi 0, %s136
      %s151 = sphi 0, %s137
      %s155 = sphi 0, %s155
      %s157 = sphi 0, %s155
      %s158 = sphi 0, %s157
      %s172 = sphi 0, %s158
      %s178 = sphi 0, %s180
      %s181 = sphi 0, %s178
      %s182 = sphi 0, %s181
      %s198 = sphi 0, %s182
      %s204 = sphi 0, %s206
      %s207 = sphi 0, %s204
      %s208 = sphi 0, %s207
      %s224 = sphi 0, %s208
    $region4: #{axial_attn_forward.6} parent=1 // loop_header_branch
      %19 = sbr.rel (%p17) target = $region8
    $region5: #{axial_attn_forward.6} parent=1 // loop_body
      %s21 = ssub.s32 %s16, 1
      %s22 = ssub.s32 %s16, 2
      %s23 = sadd.s32 %s16, 1
      %s24 = ssub.s32 %s16, %s23
      %p25 = scmp.eq.s32.totalorder %s24, 0
      %s27 = sadd.s32 %s26, 1
      %s28 = scalar_select %p25, %s26, %s27
      %p31 = pneg %p25
      %p32 = scmp.eq.s32.totalorder %s16, 31
      %p33 = por %p31, %p32
      %p34 = scmp.ne.s32.totalorder %s26, %s29
      %p35 = scmp.eq.s32.totalorder %s16, 0
      %p36 = por %p34, %p35
      %p37 = scmp.ne.s32.totalorder %s26, %s29
      %p38 = scmp.eq.s32.totalorder %s21, 31
      %p39 = por %p37, %p38
      %p40 = scmp.ne.s32.totalorder %s29, %s30
      %p41 = scmp.eq.s32.totalorder %s21, 0
      %p42 = por %p40, %p41
      %p43 = scmp.ne.s32.totalorder %s29, %s30
      %p44 = scmp.eq.s32.totalorder %s22, 31
      %p45 = por %p43, %p44
      %p47 = scmp.ne.s32.totalorder %s30, %s46
      %p48 = scmp.eq.s32.totalorder %s22, 0
      %p49 = por %p47, %p48
      %s51 = sadd.s32 %s50, 1
      %p54 = scmp.eq.s32.totalorder %s16, 31
      %p55 = scmp.ne.s32.totalorder %s50, %s52
      %p56 = scmp.eq.s32.totalorder %s16, 0
      %p57 = por %p55, %p56
      %p58 = scmp.ne.s32.totalorder %s50, %s52
      %p59 = scmp.eq.s32.totalorder %s21, 31
      %p60 = por %p58, %p59
      %p61 = scmp.ne.s32.totalorder %s52, %s53
      %p62 = scmp.eq.s32.totalorder %s21, 0
      %p63 = por %p61, %p62
      %p64 = scmp.ne.s32.totalorder %s52, %s53
      %p65 = scmp.eq.s32.totalorder %s22, 31
      %p66 = por %p64, %p65
      %p68 = scmp.ne.s32.totalorder %s53, %s67
      %p69 = scmp.eq.s32.totalorder %s22, 0
      %p70 = por %p68, %p69
      %s72 = sadd.s32 %s71, 1
      %p75 = scmp.eq.s32.totalorder %s16, 31
      %p76 = scmp.ne.s32.totalorder %s71, %s73
      %p77 = scmp.eq.s32.totalorder %s16, 0
      %p78 = por %p76, %p77
      %p79 = scmp.ne.s32.totalorder %s71, %s73
      %p80 = scmp.eq.s32.totalorder %s21, 31
      %p81 = por %p79, %p80
      %p82 = scmp.ne.s32.totalorder %s73, %s74
      %p83 = scmp.eq.s32.totalorder %s21, 0
      %p84 = por %p82, %p83
      %p85 = scmp.ne.s32.totalorder %s73, %s74
      %p86 = scmp.eq.s32.totalorder %s22, 31
      %p87 = por %p85, %p86
      %p89 = scmp.ne.s32.totalorder %s74, %s88
      %p90 = scmp.eq.s32.totalorder %s22, 0
      %p91 = por %p89, %p90
      %s93 = sadd.s32 %s92, 1
      %p96 = scmp.eq.s32.totalorder %s16, 31
      %p97 = scmp.ne.s32.totalorder %s92, %s94
      %p98 = scmp.eq.s32.totalorder %s16, 0
      %p99 = por %p97, %p98
      %p100 = scmp.ne.s32.totalorder %s92, %s94
      %p101 = scmp.eq.s32.totalorder %s21, 31
      %p102 = por %p100, %p101
      %p103 = scmp.ne.s32.totalorder %s94, %s95
      %p104 = scmp.eq.s32.totalorder %s21, 0
      %p105 = por %p103, %p104
      %p106 = scmp.ne.s32.totalorder %s94, %s95
      %p107 = scmp.eq.s32.totalorder %s22, 31
      %p108 = por %p106, %p107
      %p110 = scmp.ne.s32.totalorder %s95, %s109
      %p111 = scmp.eq.s32.totalorder %s22, 0
      %p112 = por %p110, %p111
      %s114 = sadd.s32 %s113, 1
      %p117 = scmp.eq.s32.totalorder %s16, 31
      %p118 = scmp.ne.s32.totalorder %s113, %s115
      %p119 = scmp.eq.s32.totalorder %s16, 0
      %p120 = por %p118, %p119
      %p121 = scmp.ne.s32.totalorder %s113, %s115
      %p122 = scmp.eq.s32.totalorder %s21, 31
      %p123 = por %p121, %p122
      %p124 = scmp.ne.s32.totalorder %s115, %s116
      %p125 = scmp.eq.s32.totalorder %s21, 0
      %p126 = por %p124, %p125
      %p127 = scmp.ne.s32.totalorder %s115, %s116
      %p128 = scmp.eq.s32.totalorder %s22, 31
      %p129 = por %p127, %p128
      %p131 = scmp.ne.s32.totalorder %s116, %s130
      %p132 = scmp.eq.s32.totalorder %s22, 0
      %p133 = por %p131, %p132
      %s135 = sadd.s32 %s134, 1
      %p138 = scmp.eq.s32.totalorder %s16, 31
      %p139 = scmp.ne.s32.totalorder %s134, %s136
      %p140 = scmp.eq.s32.totalorder %s16, 0
      %p141 = por %p139, %p140
      %p142 = scmp.ne.s32.totalorder %s134, %s136
      %p143 = scmp.eq.s32.totalorder %s21, 31
      %p144 = por %p142, %p143
      %p145 = scmp.ne.s32.totalorder %s136, %s137
      %p146 = scmp.eq.s32.totalorder %s21, 0
      %p147 = por %p145, %p146
      %p148 = scmp.ne.s32.totalorder %s136, %s137
      %p149 = scmp.eq.s32.totalorder %s22, 31
      %p150 = por %p148, %p149
      %p152 = scmp.ne.s32.totalorder %s137, %s151
      %p153 = scmp.eq.s32.totalorder %s22, 0
      %p154 = por %p152, %p153
      %s156 = sadd.s32 %s155, 1
      %p159 = scmp.eq.s32.totalorder %s16, 31
      %p160 = scmp.ne.s32.totalorder %s155, %s157
      %p161 = scmp.eq.s32.totalorder %s16, 0
      %p162 = por %p160, %p161
      %p163 = scmp.ne.s32.totalorder %s155, %s157
      %p164 = scmp.eq.s32.totalorder %s21, 31
      %p165 = por %p163, %p164
      %p166 = scmp.ne.s32.totalorder %s157, %s158
      %p167 = scmp.eq.s32.totalorder %s21, 0
      %p168 = por %p166, %p167
      %p169 = scmp.ne.s32.totalorder %s157, %s158
      %p170 = scmp.eq.s32.totalorder %s22, 31
      %p171 = por %p169, %p170
      %p173 = scmp.ne.s32.totalorder %s158, %s172
      %p174 = scmp.eq.s32.totalorder %s22, 0
      %p175 = por %p173, %p174
      %s176 = ssub.s32 %s16, %s23
      %p177 = scmp.eq.s32.totalorder %s176, 0
      %s179 = sadd.s32 %s178, 1
      %s180 = scalar_select %p177, %s178, %s179
      %p183 = pneg %p177
      %p184 = scmp.eq.s32.totalorder %s16, 31
      %p185 = por %p183, %p184
      %p186 = scmp.ne.s32.totalorder %s178, %s181
      %p187 = scmp.eq.s32.totalorder %s16, 0
      %p188 = por %p186, %p187
      %p189 = scmp.ne.s32.totalorder %s178, %s181
      %p190 = scmp.eq.s32.totalorder %s21, 31
      %p191 = por %p189, %p190
      %p192 = scmp.ne.s32.totalorder %s181, %s182
      %p193 = scmp.eq.s32.totalorder %s21, 0
      %p194 = por %p192, %p193
      %p195 = scmp.ne.s32.totalorder %s181, %s182
      %p196 = scmp.eq.s32.totalorder %s22, 31
      %p197 = por %p195, %p196
      %p199 = scmp.ne.s32.totalorder %s182, %s198
      %p200 = scmp.eq.s32.totalorder %s22, 0
      %p201 = por %p199, %p200
      %s202 = ssub.s32 %s16, %s23
      %p203 = scmp.eq.s32.totalorder %s202, 0
      %s205 = sadd.s32 %s204, 1
      %s206 = scalar_select %p203, %s204, %s205
      %p209 = pneg %p203
      %p210 = scmp.eq.s32.totalorder %s16, 31
      %p211 = por %p209, %p210
      %p212 = scmp.ne.s32.totalorder %s204, %s207
      %p213 = scmp.eq.s32.totalorder %s16, 0
      %p214 = por %p212, %p213
      %p215 = scmp.ne.s32.totalorder %s204, %s207
      %p216 = scmp.eq.s32.totalorder %s21, 31
      %p217 = por %p215, %p216
      %p218 = scmp.ne.s32.totalorder %s207, %s208
      %p219 = scmp.eq.s32.totalorder %s21, 0
      %p220 = por %p218, %p219
      %p221 = scmp.ne.s32.totalorder %s207, %s208
      %p222 = scmp.eq.s32.totalorder %s22, 31
      %p223 = por %p221, %p222
      %p225 = scmp.ne.s32.totalorder %s208, %s224
      %p226 = scmp.eq.s32.totalorder %s22, 0
      %p227 = por %p225, %p226
      %p228 = scmp.le.s32.totalorder 1, %s16
      %p229 = scmp.lt.s32.totalorder %s16, 33
      %p230 = pnand %p228, %p229
      %p231 = pneg %p230
      // Predicated region
      $region9: #{axial_attn_forward.6} parent=5 // pred_check
        _
      $region10: #{axial_attn_forward.6} parent=5 // pred_check_branch
        %233 = sbr.rel (%p230) target = $region12
      $region11: #{axial_attn_forward.6} parent=5 // pred_region
        %s234 = ssub.s32 %s16, 1
        // Predicated region
        $region13: #{axial_attn_forward.6} parent=11 // pred_check
          %p235 = pneg %p63
        $region14: #{axial_attn_forward.6} parent=11 // pred_check_branch
          %237 = sbr.rel (%p235) target = $region16
        $region15: #{axial_attn_forward.6} parent=11 // pred_region
          _
        $region16: #{axial_attn_forward.6} parent=11 // pred_fallthru
          _
        // Predicated region
        $region17: #{axial_attn_forward.6} parent=11 // pred_check
          %p238 = pneg %p84
        $region18: #{axial_attn_forward.6} parent=11 // pred_check_branch
          %240 = sbr.rel (%p238) target = $region20
        $region19: #{axial_attn_forward.6} parent=11 // pred_region
          _
        $region20: #{axial_attn_forward.6} parent=11 // pred_fallthru
          _
        // Predicated region
        $region21: #{axial_attn_forward.6} parent=11 // pred_check
          %p241 = pneg %p105
        $region22: #{axial_attn_forward.6} parent=11 // pred_check_branch
          %243 = sbr.rel (%p241) target = $region24
        $region23: #{axial_attn_forward.6} parent=11 // pred_region
          _
        $region24: #{axial_attn_forward.6} parent=11 // pred_fallthru
          _
        // Predicated region
        $region25: #{axial_attn_forward.6} parent=11 // pred_check
          %p244 = pneg %p126
        $region26: #{axial_attn_forward.6} parent=11 // pred_check_branch
          %246 = sbr.rel (%p244) target = $region28
        $region27: #{axial_attn_forward.6} parent=11 // pred_region
          _
        $region28: #{axial_attn_forward.6} parent=11 // pred_fallthru
          _
        // Predicated region
        $region29: #{axial_attn_forward.6} parent=11 // pred_check
          %p247 = pneg %p147
        $region30: #{axial_attn_forward.6} parent=11 // pred_check_branch
          %249 = sbr.rel (%p247) target = $region32
        $region31: #{axial_attn_forward.6} parent=11 // pred_region
          _
        $region32: #{axial_attn_forward.6} parent=11 // pred_fallthru
          _
        // Predicated region
        $region33: #{axial_attn_forward.6} parent=11 // pred_check
          %p250 = pneg %p168
        $region34: #{axial_attn_forward.6} parent=11 // pred_check_branch
          %252 = sbr.rel (%p250) target = $region36
        $region35: #{axial_attn_forward.6} parent=11 // pred_region
          %s254 = ssub.s32 32, 32
          %255 = vsyncadd [#allocation3], %s254
          %s257 = sshll.u32 %s6, 4
          %s258 = int_to_ptr.vmem [resolvable:$true] %s257
          %260 = dma.vmem_to_smem %s258, 32, [#allocation2], [#allocation3]
        $region36: #{axial_attn_forward.6} parent=11 // pred_fallthru
          _
      $region12: #{axial_attn_forward.6} parent=5 // pred_fallthru
        _
      %p261 = scmp.lt.s32.totalorder %s16, 32
      // Predicated region
      $region37: #{axial_attn_forward.6} parent=5 // pred_check
        %p262 = pneg %p261
      $region38: #{axial_attn_forward.6} parent=5 // pred_check_branch
        %264 = sbr.rel (%p262) target = $region40
      $region39: #{axial_attn_forward.6} parent=5 // pred_region
        // Predicated region
        $region41: #{axial_attn_forward.6} parent=39 // pred_check
          %p265 = pneg %p36
        $region42: #{axial_attn_forward.6} parent=39 // pred_check_branch
          %267 = sbr.rel (%p265) target = $region44
        $region43: #{axial_attn_forward.6} parent=39 // pred_region
          %p268 = scmp.lt.s32.totalorder %s16, 31
          %s269 = scalar_select %p268, %s16, 31
          %s270 = smul.addr %s269, 8
          %s271 = scalar_lea.vmem %s0, %s270
        $region44: #{axial_attn_forward.6} parent=39 // pred_fallthru
          _
      $region40: #{axial_attn_forward.6} parent=5 // pred_fallthru
        _
      %p272 = scmp.le.s32.totalorder 1, %s16
      %p273 = scmp.lt.s32.totalorder %s16, 33
      %p274 = pnand %p272, %p273
      %p275 = pneg %p274
      // Predicated region
      $region45: #{axial_attn_forward.6} parent=5 // pred_check
        _
      $region46: #{axial_attn_forward.6} parent=5 // pred_check_branch
        %277 = sbr.rel (%p274) target = $region48
      $region47: #{axial_attn_forward.6} parent=5 // pred_region
        %s278 = ssub.s32 %s16, 1
        // Predicated region
        $region49: #{axial_attn_forward.6} parent=47 // pred_check
          %p279 = pneg %p168
        $region50: #{axial_attn_forward.6} parent=47 // pred_check_branch
          %281 = sbr.rel (%p279) target = $region52
        $region51: #{axial_attn_forward.6} parent=47 // pred_region
          %282 = dma.done [#allocation3], 32
        $region52: #{axial_attn_forward.6} parent=47 // pred_fallthru
          _
        %283 = sfence
        %p284 = scmp.lt.s32.totalorder %s21, 31
        %s285 = scalar_select %p284, %s21, 31
        %s286 = smul.addr %s285, 8
        %s287 = scalar_lea.vmem %s0, %s286
        %p288 = pneg %p42
        %p289 = pneg %p39
        %p290 = pneg %p63
        %p291 = pneg %p60
        %p292 = pneg %p84
        %p293 = pneg %p81
        %p294 = pneg %p105
        %p295 = pneg %p102
        %p296 = pneg %p126
        %p297 = pneg %p123
        %p298 = pneg %p147
        %p299 = pneg %p144
        %p300 = pneg %p168
        %p301 = pneg %p165
        %p302 = pneg %p194
        %p303 = pneg %p191
        %p304 = scmp.lt.s32.totalorder %s21, 31
        %s305 = scalar_select %p304, %s21, 31
        %s306 = smul.addr %s305, 8
        %s307 = scalar_lea.vmem %s7, %s306
        %p308 = pneg %p220
        %p309 = pneg %p217
        %p310 = scmp.lt.s32.totalorder %s21, 31
        %s311 = scalar_select %p310, %s21, 31
        %s312 = smul.addr %s311, 8
        %s313 = scalar_lea.vmem %s8, %s312
        %p314 = scmp.lt.s32.totalorder %s21, 31
        %s315 = scalar_select %p314, %s21, 31
        %s316 = smul.addr %s315, 8
        %s317 = scalar_lea.vmem %s0, %s316
        %p318 = scmp.lt.s32.totalorder %s21, 31
        %s319 = scalar_select %p318, %s21, 31
        %s320 = smul.addr %s319, 8
        %s321 = scalar_lea.vmem %s7, %s320
        %p322 = scmp.lt.s32.totalorder %s21, 31
        %s323 = scalar_select %p322, %s21, 31
        %s324 = smul.addr %s323, 8
        %s325 = scalar_lea.vmem %s8, %s324
        %v326 = vld [vmem:[%s317] sm:$0xff]
        %v327 = vld [vmem:[%s1] sm:$0xff]
        %v328 = vld [vmem:[%s1 + $0x8] sm:$0xff]
        %v329 = vld [vmem:[%s2] sm:$0xff]
        %v330 = vld [vmem:[%s2 + $0x8] sm:$0xff]
        %332 = vset.pattern.permute.xlu0 0
        %333 = vperm.xlu0 %332, %v329
        %v334 = vpop.permute.xlu0 %333
        %337 = vset.pattern.permute.xlu0 0
        %338 = vperm.xlu0 %337, %v330
        %v339 = vpop.permute.xlu0 %338
        %vm341 = vcmask 64512
        %v343 = vsel %vm341, %v327, 0
        %v346 = vsel %vm341, %v328, 0
        %348 = vmatprep.subr.mxu0 0.0
        %349 = vmatpush1.msra.mxu0 %v326
        %350 = vmatprep.subr.mxu0 0.0
        %351 = vmatpush1.msra.mxu0 0.0
        %352 = vmatprep.subr.mxu0 0.0
        %353 = vmatpush1.msra.mxu0 0.0
        %354 = vmatprep.subr.mxu0 0.0
        %355 = vmatpush1.msra.mxu0 0.0
        %356 = vmatprep.subr.mxu0 0.0
        %357 = vmatpush1.msra.mxu0 0.0
        %358 = vmatprep.subr.mxu0 0.0
        %359 = vmatpush1.msra.mxu0 0.0
        %360 = vmatprep.subr.mxu0 0.0
        %361 = vmatpush1.msra.mxu0 0.0
        %362 = vmatprep.subr.mxu0 0.0
        %363 = vmatpush1.msra.mxu0 0.0
        %364 = vmatprep.subr.mxu0 0.0
        %365 = vmatpush1.msra.mxu0 0.0
        %366 = vmatprep.subr.mxu0 0.0
        %367 = vmatpush1.msra.mxu0 0.0
        %368 = vmatprep.subr.mxu0 0.0
        %369 = vmatpush1.msra.mxu0 0.0
        %370 = vmatprep.subr.mxu0 0.0
        %371 = vmatpush1.msra.mxu0 0.0
        %372 = vmatprep.subr.mxu0 0.0
        %373 = vmatpush1.msra.mxu0 0.0
        %374 = vmatprep.subr.mxu0 0.0
        %375 = vmatpush1.msra.mxu0 0.0
        %376 = vmatprep.subr.mxu0 0.0
        %377 = vmatpush1.msra.mxu0 0.0
        %378 = vmatprep.subr.mxu0 0.0
        %379 = vmatpush1.msra.mxu0 0.0
        %380 = vmatprep.subr.mxu0 0.0
        %381 = vmatpush1.msra.mxu0 0.0
        %382 = vmatprep.subr.mxu0 0.0
        %383 = vmatpush1.msra.mxu0 0.0
        %384 = vmatprep.subr.mxu0 0.0
        %385 = vmatpush1.msra.mxu0 0.0
        %386 = vmatprep.subr.mxu0 0.0
        %387 = vmatpush1.msra.mxu0 0.0
        %388 = vmatprep.subr.mxu0 0.0
        %389 = vmatpush1.msra.mxu0 0.0
        %390 = vmatprep.subr.mxu0 0.0
        %391 = vmatpush1.msra.mxu0 0.0
        %392 = vmatprep.subr.mxu0 0.0
        %393 = vmatpush1.msra.mxu0 0.0
        %394 = vmatprep.subr.mxu0 0.0
        %395 = vmatpush1.msra.mxu0 0.0
        %396 = vmatprep.subr.mxu0 0.0
        %397 = vmatpush1.msra.mxu0 0.0
        %398 = vmatprep.subr.mxu0 0.0
        %399 = vmatpush1.msra.mxu0 0.0
        %400 = vmatprep.subr.mxu0 0.0
        %401 = vmatpush1.msra.mxu0 0.0
        %402 = vmatprep.subr.mxu0 0.0
        %403 = vmatpush1.msra.mxu0 0.0
        %404 = vmatprep.subr.mxu0 0.0
        %405 = vmatpush1.msra.mxu0 0.0
        %406 = vmatprep.subr.mxu0 0.0
        %407 = vmatpush1.msra.mxu0 0.0
        %408 = vmatprep.subr.mxu0 0.0
        %409 = vmatpush1.msra.mxu0 0.0
        %410 = vmatprep.subr.mxu0 0.0
        %411 = vmatpush1.msra.mxu0 0.0
        %412 = vmatprep.mubr.f32.mxu0 0.0
        %413 = vmatmul.mubr.f32.gmra.mrb[0].mxu0 %v343
        %v414 = vpop.f32.mrb[0].mxu0
        %v415 = vadd.f32 %v334, %v414
        %v416 = vpop.f32.mrb[0].mxu0
        %417 = vmatprep.mubr.f32.mxu0 0.0
        %418 = vmatmul.mubr.f32.gmra.mrb[0].mxu0 %v346
        %v419 = vpop.f32.mrb[0].mxu0
        %v420 = vadd.f32 %v339, %v419
        %v421 = vpop.f32.mrb[0].mxu0
        %422 = vdwg.mxu0
        %v423 = vlaneseq
        %v424 = vshrl.u32 %v423, 7
        %v425 = vsub.s32 0, %v424
        %v426 = vrot.slane %v415, %v425
        %428 = vbcast.lane.b32.xlu0 %v426, 256
        %v429 = vpop.permute.xlu0 %428
        %s431 = sor.u32 256, 8
        %432 = vbcast.lane.b32.xlu0 %v426, %s431
        %v433 = vpop.permute.xlu0 %432
        %v434 = vlaneseq
        %v435 = vshrl.u32 %v434, 7
        %v436 = vsub.s32 1, %v435
        %v437 = vrot.slane %v415, %v436
        %439 = vbcast.lane.b32.xlu0 %v437, 256
        %v440 = vpop.permute.xlu0 %439
        %s442 = sor.u32 256, 8
        %443 = vbcast.lane.b32.xlu0 %v437, %s442
        %v444 = vpop.permute.xlu0 %443
        %v447 = vunpack.c.l.s4 1966171168
        %v448 = vunpack.c.0.s8 %v447
        %v449 = vlaneseq
        %v450 = vshrl.u32 %v449, 7
        %v451 = vsub.s32 %v448, %v450
        %v452 = vrot.slane %v415, %v451
        %v453 = vcombine.high %v452, %v452
        %v455 = vunpack.c.l.s4 1966171168
        %v456 = vunpack.c.0.s8 %v455
        %v457 = vlaneseq
        %v458 = vshrl.u32 %v457, 7
        %v459 = vsub.s32 %v456, %v458
        %v460 = vrot.slane %v452, %v459
        %v462 = vunpack.c.l.s4 1966171168
        %v463 = vunpack.c.0.s8 %v462
        %v464 = vlaneseq
        %v465 = vshrl.u32 %v464, 7
        %v466 = vsub.s32 %v463, %v465
        %v467 = vrot.slane %v453, %v466
        %v468 = vcombine.high %v460, %v460
        %v469 = vcombine.high %v467, %v467
        %v470 = vlaneseq
        %v471 = vshrl.u32 %v470, 7
        %v472 = vsub.s32 0, %v471
        %v473 = vrot.slane %v468, %v472
        %v474 = vlaneseq
        %v475 = vshrl.u32 %v474, 7
        %v476 = vsub.s32 0, %v475
        %v477 = vrot.slane %v469, %v476
        %v480 = vmul.f32 %v429, %v473
        %v481 = vmul.f32 %v433, %v473
        %v482 = vmul.f32 %v440, %v477
        %v483 = vmul.f32 %v444, %v477
        %vm484 = vcmask 130048
        %v485 = vsel %vm484, %v480, 0.0
        %v486 = vsel %vm484, %v482, 0.0
        %v487 = vadd.f32 %v485, %v486
        %v488 = vsel %vm484, %v481, 0.0
        %v489 = vsel %vm484, %v483, 0.0
        %v490 = vadd.f32 %v488, %v489
        %v491 = vld [vmem:[%s3] sm:$0xff]
        %v492 = vld [vmem:[%s3 + $0x8] sm:$0xff]
        %v493 = vld [vmem:[%s3 + $0x10] sm:$0xff]
        %v494 = vld [vmem:[%s3 + $0x18] sm:$0xff]
        %v495 = vmul.f32 %v429, %v491
        %v496 = vmul.f32 %v433, %v492
        %v497 = vmul.f32 %v440, %v493
        %v498 = vmul.f32 %v444, %v494
        %v499 = vsel %vm484, %v495, 0.0
        %v500 = vsel %vm484, %v497, 0.0
        %v501 = vadd.f32 %v499, %v500
        %v502 = vsel %vm484, %v496, 0.0
        %v503 = vsel %vm484, %v498, 0.0
        %v504 = vadd.f32 %v502, %v503
        %v505 = vld [vmem:[%s4] sm:$0xff]
        %v506 = vld [vmem:[%s4 + $0x8] sm:$0xff]
        %v507 = vld [vmem:[%s4 + $0x10] sm:$0xff]
        %v508 = vld [vmem:[%s4 + $0x18] sm:$0xff]
        %v509 = vlaneseq
        %v510 = vshrl.u32 %v509, 7
        %v511 = vsub.s32 2, %v510
        %v512 = vrot.slane %v415, %v511
        %514 = vbcast.lane.b32.xlu0 %v512, 256
        %v515 = vpop.permute.xlu0 %514
        %s517 = sor.u32 256, 8
        %518 = vbcast.lane.b32.xlu0 %v512, %s517
        %v519 = vpop.permute.xlu0 %518
        %v520 = vlaneseq
        %v521 = vshrl.u32 %v520, 7
        %v522 = vsub.s32 3, %v521
        %v523 = vrot.slane %v415, %v522
        %525 = vbcast.lane.b32.xlu0 %v523, 256
        %v526 = vpop.permute.xlu0 %525
        %s528 = sor.u32 256, 8
        %529 = vbcast.lane.b32.xlu0 %v523, %s528
        %v530 = vpop.permute.xlu0 %529
        %v531 = vmul.f32 %v515, %v505
        %v532 = vmul.f32 %v519, %v506
        %v533 = vmul.f32 %v526, %v507
        %v534 = vmul.f32 %v530, %v508
        %v535 = vsel %vm484, %v531, 0.0
        %v536 = vsel %vm484, %v533, 0.0
        %v537 = vadd.f32 %v535, %v536
        %v538 = vsel %vm484, %v532, 0.0
        %v539 = vsel %vm484, %v534, 0.0
        %v540 = vadd.f32 %v538, %v539
        %541 = vxpose.xlu0.b32.start [1/16] %v537, 128
        %542 = vxpose.xlu0.b32.cont [2/16] %v540, 128
        %543 = vxpose.xlu0.b32.cont [3/16] 0.0, 128
        %544 = vxpose.xlu0.b32.cont [4/16] 0.0, 128
        %545 = vxpose.xlu0.b32.cont [5/16] 0.0, 128
        %546 = vxpose.xlu0.b32.cont [6/16] 0.0, 128
        %547 = vxpose.xlu0.b32.cont [7/16] 0.0, 128
        %548 = vxpose.xlu0.b32.cont [8/16] 0.0, 128
        %549 = vxpose.xlu0.b32.cont [9/16] 0.0, 128
        %550 = vxpose.xlu0.b32.cont [10/16] 0.0, 128
        %551 = vxpose.xlu0.b32.cont [11/16] 0.0, 128
        %552 = vxpose.xlu0.b32.cont [12/16] 0.0, 128
        %553 = vxpose.xlu0.b32.cont [13/16] 0.0, 128
        %554 = vxpose.xlu0.b32.cont [14/16] 0.0, 128
        %555 = vxpose.xlu0.b32.cont [15/16] 0.0, 128
        %556 = vxpose.xlu0.b32.end [16/16] 0.0, 128
        %v557 = vpop.trf.xlu0
        %v558 = vpop.trf.xlu0
        %v559 = vpop.trf.xlu0
        %v560 = vpop.trf.xlu0
        %v561 = vpop.trf.xlu0
        %v562 = vpop.trf.xlu0
        %v563 = vpop.trf.xlu0
        %v564 = vpop.trf.xlu0
        %v565 = vpop.trf.xlu0
        %v566 = vpop.trf.xlu0
        %v567 = vpop.trf.xlu0
        %v568 = vpop.trf.xlu0
        %v569 = vpop.trf.xlu0
        %v570 = vpop.trf.xlu0
        %v571 = vpop.trf.xlu0
        %v572 = vpop.trf.xlu0
        %s573 = sld [smem:[#allocation2]]
        %v574 = vstv %s573
        %v575 = vmul.f32 %v487, %v574
        %v576 = vmul.f32 %v490, %v574
        %s577 = sld [smem:[#allocation2 + $0x2]]
        %v578 = vstv %s577
        %v579 = vmul.f32 %v501, %v578
        %v580 = vmul.f32 %v504, %v578
        %v581 = vadd.f32 %v575, %v579
        %v582 = vadd.f32 %v576, %v580
        %s583 = sld [smem:[#allocation2 + $0x4]]
        %v584 = vstv %s583
        %v585 = vmul.f32 %v557, %v584
        %v586 = vmul.f32 %v558, %v584
        %v587 = vadd.f32 %v581, %v585
        %v588 = vadd.f32 %v582, %v586
        %s589 = sld [smem:[#allocation2 + $0x80]]
        %s590 = sld [smem:[#allocation2 + $0x82]]
        %s591 = sadd.f32 %s589, %s590
        %s592 = sld [smem:[#allocation2 + $0x84]]
        %s593 = sadd.f32 %s591, %s592
        %v594 = vstv %s593
        %v595 = vadd.f32 %v587, %v594
        %v596 = vadd.f32 %v588, %v594
        %v597 = vsel %vm484, %v595, -inf
        %598 = vmax.xlane.f32.xlu0 %v597
        %v599 = vpop.xlane.xlu0 %598
        %v600 = vsel %vm484, %v596, -inf
        %601 = vmax.xlane.f32.xlu0 %v600
        %v602 = vpop.xlane.xlu0 %601
        %v603 = vsub.f32 %v595, %v599
        %v604 = vsub.f32 %v596, %v602
        %v605 = vmul.f32 %v603, 1.442695
        %v606 = vpow.pop %v605
        %v607 = vmul.f32 %v604, 1.442695
        %v608 = vpow.pop %v607
        %v609 = vsel %vm484, %v606, 0.0
        %610 = vadd.xlane.f32.xlu0 %v609
        %v611 = vpop.xlane.xlu0 %610
        %v612 = vsel %vm484, %v608, 0.0
        %613 = vadd.xlane.f32.xlu0 %v612
        %v614 = vpop.xlane.xlu0 %613
        %v615 = vrcp.pop %v611
        %v616 = vmul.f32 %v606, %v615
        %v617 = vrcp.pop %v614
        %v618 = vmul.f32 %v608, %v617
        %v619 = vrot.slane %v415, 4
        %v620 = vsel %vm484, %v619, 0
        %v623 = vsel %vm484, %v616, 0
        %v626 = vsel %vm484, %v618, 0
        %628 = vmatprep.subr.mxu0 0.0
        %629 = vmatpush1.xpose.msra.mxu0 %v623
        %630 = vmatprep.subr.mxu0 0.0
        %631 = vmatpush1.xpose.msra.mxu0 %v626
        %632 = vmatprep.subr.mxu0 0.0
        %633 = vmatpush1.xpose.msra.mxu0 0.0
        %634 = vmatprep.subr.mxu0 0.0
        %635 = vmatpush1.xpose.msra.mxu0 0.0
        %636 = vmatprep.subr.mxu0 0.0
        %637 = vmatpush1.xpose.msra.mxu0 0.0
        %638 = vmatprep.subr.mxu0 0.0
        %639 = vmatpush1.xpose.msra.mxu0 0.0
        %640 = vmatprep.subr.mxu0 0.0
        %641 = vmatpush1.xpose.msra.mxu0 0.0
        %642 = vmatprep.subr.mxu0 0.0
        %643 = vmatpush1.xpose.msra.mxu0 0.0
        %644 = vmatprep.subr.mxu0 0.0
        %645 = vmatpush1.xpose.msra.mxu0 0.0
        %646 = vmatprep.subr.mxu0 0.0
        %647 = vmatpush1.xpose.msra.mxu0 0.0
        %648 = vmatprep.subr.mxu0 0.0
        %649 = vmatpush1.xpose.msra.mxu0 0.0
        %650 = vmatprep.subr.mxu0 0.0
        %651 = vmatpush1.xpose.msra.mxu0 0.0
        %652 = vmatprep.subr.mxu0 0.0
        %653 = vmatpush1.xpose.msra.mxu0 0.0
        %654 = vmatprep.subr.mxu0 0.0
        %655 = vmatpush1.xpose.msra.mxu0 0.0
        %656 = vmatprep.subr.mxu0 0.0
        %657 = vmatpush1.xpose.msra.mxu0 0.0
        %658 = vmatprep.subr.mxu0 0.0
        %659 = vmatpush1.xpose.msra.mxu0 0.0
        %660 = vmatprep.subr.mxu0 0.0
        %661 = vmatpush1.xpose.msra.mxu0 0.0
        %662 = vmatprep.subr.mxu0 0.0
        %663 = vmatpush1.xpose.msra.mxu0 0.0
        %664 = vmatprep.subr.mxu0 0.0
        %665 = vmatpush1.xpose.msra.mxu0 0.0
        %666 = vmatprep.subr.mxu0 0.0
        %667 = vmatpush1.xpose.msra.mxu0 0.0
        %668 = vmatprep.subr.mxu0 0.0
        %669 = vmatpush1.xpose.msra.mxu0 0.0
        %670 = vmatprep.subr.mxu0 0.0
        %671 = vmatpush1.xpose.msra.mxu0 0.0
        %672 = vmatprep.subr.mxu0 0.0
        %673 = vmatpush1.xpose.msra.mxu0 0.0
        %674 = vmatprep.subr.mxu0 0.0
        %675 = vmatpush1.xpose.msra.mxu0 0.0
        %676 = vmatprep.subr.mxu0 0.0
        %677 = vmatpush1.xpose.msra.mxu0 0.0
        %678 = vmatprep.subr.mxu0 0.0
        %679 = vmatpush1.xpose.msra.mxu0 0.0
        %680 = vmatprep.subr.mxu0 0.0
        %681 = vmatpush1.xpose.msra.mxu0 0.0
        %682 = vmatprep.subr.mxu0 0.0
        %683 = vmatpush1.xpose.msra.mxu0 0.0
        %684 = vmatprep.subr.mxu0 0.0
        %685 = vmatpush1.xpose.msra.mxu0 0.0
        %686 = vmatprep.subr.mxu0 0.0
        %687 = vmatpush1.xpose.msra.mxu0 0.0
        %688 = vmatprep.subr.mxu0 0.0
        %689 = vmatpush1.xpose.msra.mxu0 0.0
        %690 = vmatprep.subr.mxu0 0.0
        %691 = vmatpush1.xpose.msra.mxu0 0.0
        %692 = vmatprep.mubr.f32.mxu0 0.0
        %693 = vmatmul.mubr.f32.gmra.mrb[0].mxu0 %v620
        %v694 = vpop.f32.mrb[0].mxu0
        %v695 = vadd.f32 0.0, %v694
        %v696 = vpop.f32.mrb[0].mxu0
        %697 = vdwg.mxu0
        %v698 = vld [vmem:[%s5] sm:$0xff]
        %v699 = vld [vmem:[%s5 + $0x8] sm:$0xff]
        %v700 = vld [vmem:[%s5 + $0x10] sm:$0xff]
        %v701 = vld [vmem:[%s5 + $0x18] sm:$0xff]
        %v702 = vld [vmem:[%s5 + $0x20] sm:$0xff]
        %v703 = vld [vmem:[%s5 + $0x28] sm:$0xff]
        %v704 = vld [vmem:[%s5 + $0x30] sm:$0xff]
        %v705 = vld [vmem:[%s5 + $0x38] sm:$0xff]
        %v706 = vmul.f32 %v698, %v616
        %v707 = vmul.f32 %v699, %v618
        %v708 = vmul.f32 %v700, %v616
        %v709 = vmul.f32 %v701, %v618
        %v710 = vmul.f32 %v702, %v616
        %v711 = vmul.f32 %v703, %v618
        %v712 = vmul.f32 %v704, %v616
        %v713 = vmul.f32 %v705, %v618
        %v714 = vsel %vm484, %v706, 0.0
        %715 = vadd.xlane.f32.xlu0 %v714
        %v716 = vpop.xlane.xlu0 %715
        %v717 = vsel %vm484, %v707, 0.0
        %718 = vadd.xlane.f32.xlu0 %v717
        %v719 = vpop.xlane.xlu0 %718
        %v720 = vsel %vm484, %v708, 0.0
        %721 = vadd.xlane.f32.xlu0 %v720
        %v722 = vpop.xlane.xlu0 %721
        %v723 = vsel %vm484, %v709, 0.0
        %724 = vadd.xlane.f32.xlu0 %v723
        %v725 = vpop.xlane.xlu0 %724
        %v726 = vsel %vm484, %v710, 0.0
        %727 = vadd.xlane.f32.xlu0 %v726
        %v728 = vpop.xlane.xlu0 %727
        %v729 = vsel %vm484, %v711, 0.0
        %730 = vadd.xlane.f32.xlu0 %v729
        %v731 = vpop.xlane.xlu0 %730
        %v732 = vsel %vm484, %v712, 0.0
        %733 = vadd.xlane.f32.xlu0 %v732
        %v734 = vpop.xlane.xlu0 %733
        %v735 = vsel %vm484, %v713, 0.0
        %736 = vadd.xlane.f32.xlu0 %v735
        %v737 = vpop.xlane.xlu0 %736
        %v738 = vlaneseq
        %v739 = vshrl.u32 %v738, 7
        %v740 = vsub.s32 0, %v739
        %v741 = vrot.slane %v420, %v740
        %743 = vbcast.lane.b32.xlu0 %v741, 256
        %v744 = vpop.permute.xlu0 %743
        %s746 = sor.u32 256, 8
        %747 = vbcast.lane.b32.xlu0 %v741, %s746
        %v748 = vpop.permute.xlu0 %747
        %v749 = vlaneseq
        %v750 = vshrl.u32 %v749, 7
        %v751 = vsub.s32 1, %v750
        %v752 = vrot.slane %v420, %v751
        %754 = vbcast.lane.b32.xlu0 %v752, 256
        %v755 = vpop.permute.xlu0 %754
        %s757 = sor.u32 256, 8
        %758 = vbcast.lane.b32.xlu0 %v752, %s757
        %v759 = vpop.permute.xlu0 %758
        %v762 = vunpack.c.l.s4 1966171168
        %v763 = vunpack.c.0.s8 %v762
        %v764 = vlaneseq
        %v765 = vshrl.u32 %v764, 7
        %v766 = vsub.s32 %v763, %v765
        %v767 = vrot.slane %v420, %v766
        %v768 = vcombine.high %v767, %v767
        %v770 = vunpack.c.l.s4 1966171168
        %v771 = vunpack.c.0.s8 %v770
        %v772 = vlaneseq
        %v773 = vshrl.u32 %v772, 7
        %v774 = vsub.s32 %v771, %v773
        %v775 = vrot.slane %v767, %v774
        %v777 = vunpack.c.l.s4 1966171168
        %v778 = vunpack.c.0.s8 %v777
        %v779 = vlaneseq
        %v780 = vshrl.u32 %v779, 7
        %v781 = vsub.s32 %v778, %v780
        %v782 = vrot.slane %v768, %v781
        %v783 = vcombine.high %v775, %v775
        %v784 = vcombine.high %v782, %v782
        %v785 = vlaneseq
        %v786 = vshrl.u32 %v785, 7
        %v787 = vsub.s32 0, %v786
        %v788 = vrot.slane %v783, %v787
        %v789 = vlaneseq
        %v790 = vshrl.u32 %v789, 7
        %v791 = vsub.s32 0, %v790
        %v792 = vrot.slane %v784, %v791
        %v795 = vmul.f32 %v744, %v788
        %v796 = vmul.f32 %v748, %v788
        %v797 = vmul.f32 %v755, %v792
        %v798 = vmul.f32 %v759, %v792
        %v799 = vsel %vm484, %v795, 0.0
        %v800 = vsel %vm484, %v797, 0.0
        %v801 = vadd.f32 %v799, %v800
        %v802 = vsel %vm484, %v796, 0.0
        %v803 = vsel %vm484, %v798, 0.0
        %v804 = vadd.f32 %v802, %v803
        %v805 = vmul.f32 %v744, %v491
        %v806 = vmul.f32 %v748, %v492
        %v807 = vmul.f32 %v755, %v493
        %v808 = vmul.f32 %v759, %v494
        %v809 = vsel %vm484, %v805, 0.0
        %v810 = vsel %vm484, %v807, 0.0
        %v811 = vadd.f32 %v809, %v810
        %v812 = vsel %vm484, %v806, 0.0
        %v813 = vsel %vm484, %v808, 0.0
        %v814 = vadd.f32 %v812, %v813
        %v815 = vlaneseq
        %v816 = vshrl.u32 %v815, 7
        %v817 = vsub.s32 2, %v816
        %v818 = vrot.slane %v420, %v817
        %820 = vbcast.lane.b32.xlu0 %v818, 256
        %v821 = vpop.permute.xlu0 %820
        %s823 = sor.u32 256, 8
        %824 = vbcast.lane.b32.xlu0 %v818, %s823
        %v825 = vpop.permute.xlu0 %824
        %v826 = vlaneseq
        %v827 = vshrl.u32 %v826, 7
        %v828 = vsub.s32 3, %v827
        %v829 = vrot.slane %v420, %v828
        %831 = vbcast.lane.b32.xlu0 %v829, 256
        %v832 = vpop.permute.xlu0 %831
        %s834 = sor.u32 256, 8
        %835 = vbcast.lane.b32.xlu0 %v829, %s834
        %v836 = vpop.permute.xlu0 %835
        %v837 = vmul.f32 %v821, %v505
        %v838 = vmul.f32 %v825, %v506
        %v839 = vmul.f32 %v832, %v507
        %v840 = vmul.f32 %v836, %v508
        %v841 = vsel %vm484, %v837, 0.0
        %v842 = vsel %vm484, %v839, 0.0
        %v843 = vadd.f32 %v841, %v842
        %v844 = vsel %vm484, %v838, 0.0
        %v845 = vsel %vm484, %v840, 0.0
        %v846 = vadd.f32 %v844, %v845
        %847 = vxpose.xlu0.b32.start [1/16] %v843, 128
        %848 = vxpose.xlu0.b32.cont [2/16] %v846, 128
        %849 = vxpose.xlu0.b32.cont [3/16] 0.0, 128
        %850 = vxpose.xlu0.b32.cont [4/16] 0.0, 128
        %851 = vxpose.xlu0.b32.cont [5/16] 0.0, 128
        %852 = vxpose.xlu0.b32.cont [6/16] 0.0, 128
        %853 = vxpose.xlu0.b32.cont [7/16] 0.0, 128
        %854 = vxpose.xlu0.b32.cont [8/16] 0.0, 128
        %855 = vxpose.xlu0.b32.cont [9/16] 0.0, 128
        %856 = vxpose.xlu0.b32.cont [10/16] 0.0, 128
        %857 = vxpose.xlu0.b32.cont [11/16] 0.0, 128
        %858 = vxpose.xlu0.b32.cont [12/16] 0.0, 128
        %859 = vxpose.xlu0.b32.cont [13/16] 0.0, 128
        %860 = vxpose.xlu0.b32.cont [14/16] 0.0, 128
        %861 = vxpose.xlu0.b32.cont [15/16] 0.0, 128
        %862 = vxpose.xlu0.b32.end [16/16] 0.0, 128
        %v863 = vpop.trf.xlu0
        %v864 = vpop.trf.xlu0
        %v865 = vpop.trf.xlu0
        %v866 = vpop.trf.xlu0
        %v867 = vpop.trf.xlu0
        %v868 = vpop.trf.xlu0
        %v869 = vpop.trf.xlu0
        %v870 = vpop.trf.xlu0
        %v871 = vpop.trf.xlu0
        %v872 = vpop.trf.xlu0
        %v873 = vpop.trf.xlu0
        %v874 = vpop.trf.xlu0
        %v875 = vpop.trf.xlu0
        %v876 = vpop.trf.xlu0
        %v877 = vpop.trf.xlu0
        %v878 = vpop.trf.xlu0
        %s879 = sld [smem:[#allocation2 + $0x1]]
        %v880 = vstv %s879
        %v881 = vmul.f32 %v801, %v880
        %v882 = vmul.f32 %v804, %v880
        %s883 = sld [smem:[#allocation2 + $0x3]]
        %v884 = vstv %s883
        %v885 = vmul.f32 %v811, %v884
        %v886 = vmul.f32 %v814, %v884
        %v887 = vadd.f32 %v881, %v885
        %v888 = vadd.f32 %v882, %v886
        %s889 = sld [smem:[#allocation2 + $0x5]]
        %v890 = vstv %s889
        %v891 = vmul.f32 %v863, %v890
        %v892 = vmul.f32 %v864, %v890
        %v893 = vadd.f32 %v887, %v891
        %v894 = vadd.f32 %v888, %v892
        %s895 = sld [smem:[#allocation2 + $0x81]]
        %s896 = sld [smem:[#allocation2 + $0x83]]
        %s897 = sadd.f32 %s895, %s896
        %s898 = sld [smem:[#allocation2 + $0x85]]
        %s899 = sadd.f32 %s897, %s898
        %v900 = vstv %s899
        %v901 = vadd.f32 %v893, %v900
        %v902 = vadd.f32 %v894, %v900
        %v903 = vsel %vm484, %v901, -inf
        %904 = vmax.xlane.f32.xlu0 %v903
        %v905 = vpop.xlane.xlu0 %904
        %v906 = vsel %vm484, %v902, -inf
        %907 = vmax.xlane.f32.xlu0 %v906
        %v908 = vpop.xlane.xlu0 %907
        %v909 = vsub.f32 %v901, %v905
        %v910 = vsub.f32 %v902, %v908
        %v911 = vmul.f32 %v909, 1.442695
        %v912 = vpow.pop %v911
        %v913 = vmul.f32 %v910, 1.442695
        %v914 = vpow.pop %v913
        %v915 = vsel %vm484, %v912, 0.0
        %916 = vadd.xlane.f32.xlu0 %v915
        %v917 = vpop.xlane.xlu0 %916
        %v918 = vsel %vm484, %v914, 0.0
        %919 = vadd.xlane.f32.xlu0 %v918
        %v920 = vpop.xlane.xlu0 %919
        %v921 = vrcp.pop %v917
        %v922 = vmul.f32 %v912, %v921
        %v923 = vrcp.pop %v920
        %v924 = vmul.f32 %v914, %v923
        %v925 = vrot.slane %v420, 4
        %v926 = vsel %vm484, %v925, 0
        %v929 = vsel %vm484, %v922, 0
        %v932 = vsel %vm484, %v924, 0
        %934 = vmatprep.subr.mxu0 0.0
        %935 = vmatpush1.xpose.msra.mxu0 %v929
        %936 = vmatprep.subr.mxu0 0.0
        %937 = vmatpush1.xpose.msra.mxu0 %v932
        %938 = vmatprep.subr.mxu0 0.0
        %939 = vmatpush1.xpose.msra.mxu0 0.0
        %940 = vmatprep.subr.mxu0 0.0
        %941 = vmatpush1.xpose.msra.mxu0 0.0
        %942 = vmatprep.subr.mxu0 0.0
        %943 = vmatpush1.xpose.msra.mxu0 0.0
        %944 = vmatprep.subr.mxu0 0.0
        %945 = vmatpush1.xpose.msra.mxu0 0.0
        %946 = vmatprep.subr.mxu0 0.0
        %947 = vmatpush1.xpose.msra.mxu0 0.0
        %948 = vmatprep.subr.mxu0 0.0
        %949 = vmatpush1.xpose.msra.mxu0 0.0
        %950 = vmatprep.subr.mxu0 0.0
        %951 = vmatpush1.xpose.msra.mxu0 0.0
        %952 = vmatprep.subr.mxu0 0.0
        %953 = vmatpush1.xpose.msra.mxu0 0.0
        %954 = vmatprep.subr.mxu0 0.0
        %955 = vmatpush1.xpose.msra.mxu0 0.0
        %956 = vmatprep.subr.mxu0 0.0
        %957 = vmatpush1.xpose.msra.mxu0 0.0
        %958 = vmatprep.subr.mxu0 0.0
        %959 = vmatpush1.xpose.msra.mxu0 0.0
        %960 = vmatprep.subr.mxu0 0.0
        %961 = vmatpush1.xpose.msra.mxu0 0.0
        %962 = vmatprep.subr.mxu0 0.0
        %963 = vmatpush1.xpose.msra.mxu0 0.0
        %964 = vmatprep.subr.mxu0 0.0
        %965 = vmatpush1.xpose.msra.mxu0 0.0
        %966 = vmatprep.subr.mxu0 0.0
        %967 = vmatpush1.xpose.msra.mxu0 0.0
        %968 = vmatprep.subr.mxu0 0.0
        %969 = vmatpush1.xpose.msra.mxu0 0.0
        %970 = vmatprep.subr.mxu0 0.0
        %971 = vmatpush1.xpose.msra.mxu0 0.0
        %972 = vmatprep.subr.mxu0 0.0
        %973 = vmatpush1.xpose.msra.mxu0 0.0
        %974 = vmatprep.subr.mxu0 0.0
        %975 = vmatpush1.xpose.msra.mxu0 0.0
        %976 = vmatprep.subr.mxu0 0.0
        %977 = vmatpush1.xpose.msra.mxu0 0.0
        %978 = vmatprep.subr.mxu0 0.0
        %979 = vmatpush1.xpose.msra.mxu0 0.0
        %980 = vmatprep.subr.mxu0 0.0
        %981 = vmatpush1.xpose.msra.mxu0 0.0
        %982 = vmatprep.subr.mxu0 0.0
        %983 = vmatpush1.xpose.msra.mxu0 0.0
        %984 = vmatprep.subr.mxu0 0.0
        %985 = vmatpush1.xpose.msra.mxu0 0.0
        %986 = vmatprep.subr.mxu0 0.0
        %987 = vmatpush1.xpose.msra.mxu0 0.0
        %988 = vmatprep.subr.mxu0 0.0
        %989 = vmatpush1.xpose.msra.mxu0 0.0
        %990 = vmatprep.subr.mxu0 0.0
        %991 = vmatpush1.xpose.msra.mxu0 0.0
        %992 = vmatprep.subr.mxu0 0.0
        %993 = vmatpush1.xpose.msra.mxu0 0.0
        %994 = vmatprep.subr.mxu0 0.0
        %995 = vmatpush1.xpose.msra.mxu0 0.0
        %996 = vmatprep.subr.mxu0 0.0
        %997 = vmatpush1.xpose.msra.mxu0 0.0
        %998 = vmatprep.mubr.f32.mxu0 0.0
        %999 = vmatmul.mubr.f32.gmra.mrb[0].mxu0 %v926
        %v1000 = vpop.f32.mrb[0].mxu0
        %v1001 = vadd.f32 0.0, %v1000
        %v1002 = vpop.f32.mrb[0].mxu0
        %1003 = vdwg.mxu0
        %v1004 = vmul.f32 %v698, %v922
        %v1005 = vmul.f32 %v699, %v924
        %v1006 = vmul.f32 %v700, %v922
        %v1007 = vmul.f32 %v701, %v924
        %v1008 = vmul.f32 %v702, %v922
        %v1009 = vmul.f32 %v703, %v924
        %v1010 = vmul.f32 %v704, %v922
        %v1011 = vmul.f32 %v705, %v924
        %v1012 = vsel %vm484, %v1004, 0.0
        %1013 = vadd.xlane.f32.xlu0 %v1012
        %v1014 = vpop.xlane.xlu0 %1013
        %v1015 = vsel %vm484, %v1005, 0.0
        %1016 = vadd.xlane.f32.xlu0 %v1015
        %v1017 = vpop.xlane.xlu0 %1016
        %v1018 = vsel %vm484, %v1006, 0.0
        %1019 = vadd.xlane.f32.xlu0 %v1018
        %v1020 = vpop.xlane.xlu0 %1019
        %v1021 = vsel %vm484, %v1007, 0.0
        %1022 = vadd.xlane.f32.xlu0 %v1021
        %v1023 = vpop.xlane.xlu0 %1022
        %v1024 = vsel %vm484, %v1008, 0.0
        %1025 = vadd.xlane.f32.xlu0 %v1024
        %v1026 = vpop.xlane.xlu0 %1025
        %v1027 = vsel %vm484, %v1009, 0.0
        %1028 = vadd.xlane.f32.xlu0 %v1027
        %v1029 = vpop.xlane.xlu0 %1028
        %v1030 = vsel %vm484, %v1010, 0.0
        %1031 = vadd.xlane.f32.xlu0 %v1030
        %v1032 = vpop.xlane.xlu0 %1031
        %v1033 = vsel %vm484, %v1011, 0.0
        %1034 = vadd.xlane.f32.xlu0 %v1033
        %v1035 = vpop.xlane.xlu0 %1034
        %v1037 = vrot.slane %v1001, 4
        %vm1039 = vcmask 1043456
        %v1040 = vsel %vm1039, %v695, %v1037
        %1041 = vst.msk [vmem:[%s321] sm:$0xff] %vm484, %v1040
        %v1050 = vlaneseq
        %v1051 = vand.u32 %v1050, 127
        %v1052 = vlaneseq
        %v1053 = vshrl.u32 %v1052, 7
        %v1054 = vsub.s32 %v1051, %v1053
        %v1055 = vrot.slane %v716, %v1054
        %v1056 = vadd.s32 %v1051, 4294967288
        %v1057 = vlaneseq
        %v1058 = vshrl.u32 %v1057, 7
        %v1059 = vsub.s32 %v1056, %v1058
        %v1060 = vrot.slane %v719, %v1059
        %vm1061 = vcmask 130112
        %v1062 = vsel %vm1061, %v1060, %v1055
        %v1063 = vlaneseq
        %v1064 = vshrl.u32 %v1063, 7
        %v1065 = vsub.s32 %v1051, %v1064
        %v1066 = vrot.slane %v722, %v1065
        %v1067 = vlaneseq
        %v1068 = vshrl.u32 %v1067, 7
        %v1069 = vsub.s32 %v1056, %v1068
        %v1070 = vrot.slane %v725, %v1069
        %v1071 = vsel %vm1061, %v1070, %v1066
        %v1072 = vlaneseq
        %v1073 = vshrl.u32 %v1072, 7
        %v1074 = vsub.s32 %v1051, %v1073
        %v1075 = vrot.slane %v728, %v1074
        %v1076 = vlaneseq
        %v1077 = vshrl.u32 %v1076, 7
        %v1078 = vsub.s32 %v1056, %v1077
        %v1079 = vrot.slane %v731, %v1078
        %v1080 = vsel %vm1061, %v1079, %v1075
        %v1081 = vlaneseq
        %v1082 = vshrl.u32 %v1081, 7
        %v1083 = vsub.s32 %v1051, %v1082
        %v1084 = vrot.slane %v734, %v1083
        %v1085 = vlaneseq
        %v1086 = vshrl.u32 %v1085, 7
        %v1087 = vsub.s32 %v1056, %v1086
        %v1088 = vrot.slane %v737, %v1087
        %v1089 = vsel %vm1061, %v1088, %v1084
        %vm1090 = vcmask 1041409
        %v1091 = vsel %vm1090, %v1071, %v1062
        %vm1092 = vcmask 1042434
        %v1093 = vsel %vm1092, %v1080, %v1091
        %vm1094 = vcmask 1043459
        %v1095 = vsel %vm1094, %v1089, %v1093
        %v1105 = vlaneseq
        %v1106 = vshrl.u32 %v1105, 7
        %v1107 = vsub.s32 %v1051, %v1106
        %v1108 = vrot.slane %v1014, %v1107
        %v1109 = vlaneseq
        %v1110 = vshrl.u32 %v1109, 7
        %v1111 = vsub.s32 %v1056, %v1110
        %v1112 = vrot.slane %v1017, %v1111
        %v1113 = vsel %vm1061, %v1112, %v1108
        %v1114 = vlaneseq
        %v1115 = vshrl.u32 %v1114, 7
        %v1116 = vsub.s32 %v1051, %v1115
        %v1117 = vrot.slane %v1020, %v1116
        %v1118 = vlaneseq
        %v1119 = vshrl.u32 %v1118, 7
        %v1120 = vsub.s32 %v1056, %v1119
        %v1121 = vrot.slane %v1023, %v1120
        %v1122 = vsel %vm1061, %v1121, %v1117
        %v1123 = vlaneseq
        %v1124 = vshrl.u32 %v1123, 7
        %v1125 = vsub.s32 %v1051, %v1124
        %v1126 = vrot.slane %v1026, %v1125
        %v1127 = vlaneseq
        %v1128 = vshrl.u32 %v1127, 7
        %v1129 = vsub.s32 %v1056, %v1128
        %v1130 = vrot.slane %v1029, %v1129
        %v1131 = vsel %vm1061, %v1130, %v1126
        %v1132 = vlaneseq
        %v1133 = vshrl.u32 %v1132, 7
        %v1134 = vsub.s32 %v1051, %v1133
        %v1135 = vrot.slane %v1032, %v1134
        %v1136 = vlaneseq
        %v1137 = vshrl.u32 %v1136, 7
        %v1138 = vsub.s32 %v1056, %v1137
        %v1139 = vrot.slane %v1035, %v1138
        %v1140 = vsel %vm1061, %v1139, %v1135
        %vm1141 = vcmask 1045509
        %v1142 = vsel %vm1141, %v1122, %v1113
        %vm1143 = vcmask 1046534
        %v1144 = vsel %vm1143, %v1131, %v1142
        %vm1145 = vcmask 1047559
        %v1146 = vsel %vm1145, %v1140, %v1144
        %v1148 = vsel %vm1039, %v1095, %v1146
        %1149 = vst.msk [vmem:[%s325] sm:$0xff] %vm484, %v1148
        %p1150 = scmp.lt.s32.totalorder %s21, 31
        %s1151 = scalar_select %p1150, %s21, 31
        %s1152 = smul.addr %s1151, 8
        %s1153 = scalar_lea.vmem %s7, %s1152
        %p1154 = scmp.lt.s32.totalorder %s21, 31
        %s1155 = scalar_select %p1154, %s21, 31
        %s1156 = smul.addr %s1155, 8
        %s1157 = scalar_lea.vmem %s8, %s1156
        // Predicated region
        $region53: #{axial_attn_forward.6} parent=47 // pred_check
          %p1158 = pneg %p191
        $region54: #{axial_attn_forward.6} parent=47 // pred_check_branch
          %1160 = sbr.rel (%p1158) target = $region56
        $region55: #{axial_attn_forward.6} parent=47 // pred_region
          _
        $region56: #{axial_attn_forward.6} parent=47 // pred_fallthru
          _
        // Predicated region
        $region57: #{axial_attn_forward.6} parent=47 // pred_check
          %p1161 = pneg %p217
        $region58: #{axial_attn_forward.6} parent=47 // pred_check_branch
          %1163 = sbr.rel (%p1161) target = $region60
        $region59: #{axial_attn_forward.6} parent=47 // pred_region
          _
        $region60: #{axial_attn_forward.6} parent=47 // pred_fallthru
          _
      $region48: #{axial_attn_forward.6} parent=5 // pred_fallthru
        _
      %p1164 = scmp.le.s32.totalorder 2, %s16
      // Predicated region
      $region61: #{axial_attn_forward.6} parent=5 // pred_check
        %p1165 = pneg %p1164
      $region62: #{axial_attn_forward.6} parent=5 // pred_check_branch
        %1167 = sbr.rel (%p1165) target = $region64
      $region63: #{axial_attn_forward.6} parent=5 // pred_region
        %s1168 = ssub.s32 %s16, 2
        // Predicated region
        $region65: #{axial_attn_forward.6} parent=63 // pred_check
          %p1169 = pneg %p197
        $region66: #{axial_attn_forward.6} parent=63 // pred_check_branch
          %1171 = sbr.rel (%p1169) target = $region68
        $region67: #{axial_attn_forward.6} parent=63 // pred_region
          %p1172 = scmp.lt.s32.totalorder %s22, 31
          %s1173 = scalar_select %p1172, %s22, 31
          %s1174 = smul.addr %s1173, 8
          %s1175 = scalar_lea.vmem %s7, %s1174
        $region68: #{axial_attn_forward.6} parent=63 // pred_fallthru
          _
        // Predicated region
        $region69: #{axial_attn_forward.6} parent=63 // pred_check
          %p1176 = pneg %p223
        $region70: #{axial_attn_forward.6} parent=63 // pred_check_branch
          %1178 = sbr.rel (%p1176) target = $region72
        $region71: #{axial_attn_forward.6} parent=63 // pred_region
          %p1179 = scmp.lt.s32.totalorder %s22, 31
          %s1180 = scalar_select %p1179, %s22, 31
          %s1181 = smul.addr %s1180, 8
          %s1182 = scalar_lea.vmem %s8, %s1181
        $region72: #{axial_attn_forward.6} parent=63 // pred_fallthru
          _
      $region64: #{axial_attn_forward.6} parent=5 // pred_fallthru
        _
    $region6: #{axial_attn_forward.6} parent=1 // loop_footer
      %s20 = sadd.s32 1, %s16
    $region7: #{axial_attn_forward.6} parent=1 // loop_footer_branch
      %15 = sbr.rel target = $region3
    $region8: #{axial_attn_forward.6} parent=1 // loop_exit
      _
    %1183 = vsyncpa [#allocation3], 1
    %s1184 = scalar_lea.sflag [#allocation3], 1
    %1185 = vsyncpa %s1184, 1

// kernel: axial_attn_forward.9
$region0: #{axial_attn_forward.9}
  #allocation0 [shape = 'u32[]', space=smem, size = 0x4, offset = 0x4, fixed_abs, tag = 'smem constant byte address 0x4 - core index']
  #allocation1 [shape = 'u32[144,128]{1,0:T(1,128)}', space=vmem, size = 0x12000, scoped, tag = 'internal scratch']
  %s0 = inlined_call_operand.vmem [shape: f32[2,8,16,16], index: 0, kind: input, shape index: {}]
  %s1 = inlined_call_operand.vmem [shape: f32[2,8,16,16], index: 1, kind: input, shape index: {}]
  %s2 = inlined_call_operand.hbm [shape: f32[2,8,16,16], index: 2, kind: output, shape index: {}]
  %s3 = sld [smem:[#allocation0]]
  $region41: #{axial_attn_forward.9} parent=0
    _
  %s5 = ssub.s32 1, %s3
  %s6 = scalar_select 0, %s5, %s3
  $region1: #{axial_attn_forward.9} parent=0
    #allocation2 [shape = 'u8[131072]{0}', space=vmem, size = 0x20000, scoped, tag = 'output window, operand 0']
    #allocation3 [shape = 's32[2]{0}', space=sflag, size = 0x8, scoped, tag = 'scoped memory for axial_attn_forward.9']
    %7 = vsyncpa [#allocation3], 0
    %s8 = scalar_lea.sflag [#allocation3], 1
    %9 = vsyncpa %s8, 0
    loop: start=0, step=1, limit=4
    $region2: #{axial_attn_forward.9} parent=1 // loop_pre_header
      _
    $region3: #{axial_attn_forward.9} parent=1 // loop_header
      %s11 = sphi 0, %s15
      %p12 = scmp.ge.s32.totalorder %s11, 4
      %s21 = sphi 0, %s23
      %s24 = sphi 0, %s21
      %s25 = sphi 0, %s24
      %s41 = sphi 0, %s25
      %s47 = sphi 0, %s49
      %s50 = sphi 0, %s47
      %s51 = sphi 0, %s50
      %s67 = sphi 0, %s51
      %s73 = sphi 0, %s75
      %s76 = sphi 0, %s73
      %s77 = sphi 0, %s76
      %s93 = sphi 0, %s77
    $region4: #{axial_attn_forward.9} parent=1 // loop_header_branch
      %14 = sbr.rel (%p12) target = $region8
    $region5: #{axial_attn_forward.9} parent=1 // loop_body
      %s16 = ssub.s32 %s11, 1
      %s17 = ssub.s32 %s11, 2
      %s18 = sadd.s32 %s11, 1
      %s19 = ssub.s32 %s11, %s18
      %p20 = scmp.eq.s32.totalorder %s19, 0
      %s22 = sadd.s32 %s21, 1
      %s23 = scalar_select %p20, %s21, %s22
      %p26 = pneg %p20
      %p27 = scmp.eq.s32.totalorder %s11, 1
      %p28 = por %p26, %p27
      %p29 = scmp.ne.s32.totalorder %s21, %s24
      %p30 = scmp.eq.s32.totalorder %s11, 0
      %p31 = por %p29, %p30
      %p32 = scmp.ne.s32.totalorder %s21, %s24
      %p33 = scmp.eq.s32.totalorder %s16, 1
      %p34 = por %p32, %p33
      %p35 = scmp.ne.s32.totalorder %s24, %s25
      %p36 = scmp.eq.s32.totalorder %s16, 0
      %p37 = por %p35, %p36
      %p38 = scmp.ne.s32.totalorder %s24, %s25
      %p39 = scmp.eq.s32.totalorder %s17, 1
      %p40 = por %p38, %p39
      %p42 = scmp.ne.s32.totalorder %s25, %s41
      %p43 = scmp.eq.s32.totalorder %s17, 0
      %p44 = por %p42, %p43
      %s45 = ssub.s32 %s11, %s18
      %p46 = scmp.eq.s32.totalorder %s45, 0
      %s48 = sadd.s32 %s47, 1
      %s49 = scalar_select %p46, %s47, %s48
      %p52 = pneg %p46
      %p53 = scmp.eq.s32.totalorder %s11, 1
      %p54 = por %p52, %p53
      %p55 = scmp.ne.s32.totalorder %s47, %s50
      %p56 = scmp.eq.s32.totalorder %s11, 0
      %p57 = por %p55, %p56
      %p58 = scmp.ne.s32.totalorder %s47, %s50
      %p59 = scmp.eq.s32.totalorder %s16, 1
      %p60 = por %p58, %p59
      %p61 = scmp.ne.s32.totalorder %s50, %s51
      %p62 = scmp.eq.s32.totalorder %s16, 0
      %p63 = por %p61, %p62
      %p64 = scmp.ne.s32.totalorder %s50, %s51
      %p65 = scmp.eq.s32.totalorder %s17, 1
      %p66 = por %p64, %p65
      %p68 = scmp.ne.s32.totalorder %s51, %s67
      %p69 = scmp.eq.s32.totalorder %s17, 0
      %p70 = por %p68, %p69
      %s71 = ssub.s32 %s11, %s18
      %p72 = scmp.eq.s32.totalorder %s71, 0
      %s74 = sadd.s32 %s73, 1
      %s75 = scalar_select %p72, %s73, %s74
      %p78 = pneg %p72
      %p79 = scmp.eq.s32.totalorder %s11, 1
      %p80 = por %p78, %p79
      %p81 = scmp.ne.s32.totalorder %s73, %s76
      %p82 = scmp.eq.s32.totalorder %s11, 0
      %p83 = por %p81, %p82
      %p84 = scmp.ne.s32.totalorder %s73, %s76
      %p85 = scmp.eq.s32.totalorder %s16, 1
      %p86 = por %p84, %p85
      %p87 = scmp.ne.s32.totalorder %s76, %s77
      %p88 = scmp.eq.s32.totalorder %s16, 0
      %p89 = por %p87, %p88
      %p90 = scmp.ne.s32.totalorder %s76, %s77
      %p91 = scmp.eq.s32.totalorder %s17, 1
      %p92 = por %p90, %p91
      %p94 = scmp.ne.s32.totalorder %s77, %s93
      %p95 = scmp.eq.s32.totalorder %s17, 0
      %p96 = por %p94, %p95
      %p97 = scmp.le.s32.totalorder 1, %s11
      %p98 = scmp.lt.s32.totalorder %s11, 3
      %p99 = pnand %p97, %p98
      %p100 = pneg %p99
      // Predicated region
      $region9: #{axial_attn_forward.9} parent=5 // pred_check
        _
      $region10: #{axial_attn_forward.9} parent=5 // pred_check_branch
        %102 = sbr.rel (%p99) target = $region12
      $region11: #{axial_attn_forward.9} parent=5 // pred_region
        %s103 = ssub.s32 %s11, 1
      $region12: #{axial_attn_forward.9} parent=5 // pred_fallthru
        _
      %p104 = scmp.lt.s32.totalorder %s11, 2
      // Predicated region
      $region13: #{axial_attn_forward.9} parent=5 // pred_check
        %p105 = pneg %p104
      $region14: #{axial_attn_forward.9} parent=5 // pred_check_branch
        %107 = sbr.rel (%p105) target = $region16
      $region15: #{axial_attn_forward.9} parent=5 // pred_region
        // Predicated region
        $region17: #{axial_attn_forward.9} parent=15 // pred_check
          %p108 = pneg %p31
        $region18: #{axial_attn_forward.9} parent=15 // pred_check_branch
          %110 = sbr.rel (%p108) target = $region20
        $region19: #{axial_attn_forward.9} parent=15 // pred_region
          %p111 = scmp.lt.s32.totalorder %s11, 1
          %s112 = scalar_select %p111, %s11, 1
          %s113 = smul.addr %s112, 16
          %s114 = smul.addr %s113, 8
          %s115 = scalar_lea.vmem %s0, %s114
        $region20: #{axial_attn_forward.9} parent=15 // pred_fallthru
          _
        // Predicated region
        $region21: #{axial_attn_forward.9} parent=15 // pred_check
          %p116 = pneg %p57
        $region22: #{axial_attn_forward.9} parent=15 // pred_check_branch
          %118 = sbr.rel (%p116) target = $region24
        $region23: #{axial_attn_forward.9} parent=15 // pred_region
          %p119 = scmp.lt.s32.totalorder %s11, 1
          %s120 = scalar_select %p119, %s11, 1
          %s121 = smul.addr %s120, 16
          %s122 = smul.addr %s121, 8
          %s123 = scalar_lea.vmem %s1, %s122
        $region24: #{axial_attn_forward.9} parent=15 // pred_fallthru
          _
      $region16: #{axial_attn_forward.9} parent=5 // pred_fallthru
        _
      %p124 = scmp.le.s32.totalorder 1, %s11
      %p125 = scmp.lt.s32.totalorder %s11, 3
      %p126 = pnand %p124, %p125
      %p127 = pneg %p126
      // Predicated region
      $region25: #{axial_attn_forward.9} parent=5 // pred_check
        _
      $region26: #{axial_attn_forward.9} parent=5 // pred_check_branch
        %129 = sbr.rel (%p126) target = $region28
      $region27: #{axial_attn_forward.9} parent=5 // pred_region
        %s130 = ssub.s32 %s11, 1
        %p131 = scmp.lt.s32.totalorder %s16, 1
        %s132 = scalar_select %p131, %s16, 1
        %s133 = smul.addr %s132, 16
        %s134 = smul.addr %s133, 8
        %s135 = scalar_lea.vmem %s0, %s134
        %p136 = pneg %p37
        %p137 = pneg %p34
        %p138 = scmp.lt.s32.totalorder %s16, 1
        %s139 = scalar_select %p138, %s16, 1
        %s140 = smul.addr %s139, 16
        %s141 = smul.addr %s140, 8
        %s142 = scalar_lea.vmem %s1, %s141
        %p143 = pneg %p63
        %p144 = pneg %p60
        %p145 = pneg %p89
        %p146 = pneg %p86
        %s147 = sand.u32 %s76, 1
        %s148 = scalar_lea.sflag [#allocation3], %s147
        %s149 = sand.u32 %s76, 1
        %s150 = smul.addr %s149, 128
        %s151 = scalar_lea.vmem [#allocation2], %s150
        %p152 = scmp.lt.s32.totalorder %s16, 1
        %s153 = scalar_select %p152, %s16, 1
        %s154 = smul.addr %s153, 16
        %s155 = smul.addr %s154, 8
        %s156 = scalar_lea.vmem %s0, %s155
        %p157 = scmp.lt.s32.totalorder %s16, 1
        %s158 = scalar_select %p157, %s16, 1
        %s159 = smul.addr %s158, 16
        %s160 = smul.addr %s159, 8
        %s161 = scalar_lea.vmem %s1, %s160
        %v162 = vld [vmem:[%s156] sm:$0xff]
        %v163 = vld [vmem:[%s156 + $0x8] sm:$0xff]
        %v164 = vld [vmem:[%s156 + $0x10] sm:$0xff]
        %v165 = vld [vmem:[%s156 + $0x18] sm:$0xff]
        %v166 = vld [vmem:[%s156 + $0x20] sm:$0xff]
        %v167 = vld [vmem:[%s156 + $0x28] sm:$0xff]
        %v168 = vld [vmem:[%s156 + $0x30] sm:$0xff]
        %v169 = vld [vmem:[%s156 + $0x38] sm:$0xff]
        %v170 = vld [vmem:[%s156 + $0x40] sm:$0xff]
        %v171 = vld [vmem:[%s156 + $0x48] sm:$0xff]
        %v172 = vld [vmem:[%s156 + $0x50] sm:$0xff]
        %v173 = vld [vmem:[%s156 + $0x58] sm:$0xff]
        %v174 = vld [vmem:[%s156 + $0x60] sm:$0xff]
        %v175 = vld [vmem:[%s156 + $0x68] sm:$0xff]
        %v176 = vld [vmem:[%s156 + $0x70] sm:$0xff]
        %v177 = vld [vmem:[%s156 + $0x78] sm:$0xff]
        %v178 = vld [vmem:[%s161] sm:$0xff]
        %v179 = vld [vmem:[%s161 + $0x8] sm:$0xff]
        %v180 = vld [vmem:[%s161 + $0x10] sm:$0xff]
        %v181 = vld [vmem:[%s161 + $0x18] sm:$0xff]
        %v182 = vld [vmem:[%s161 + $0x20] sm:$0xff]
        %v183 = vld [vmem:[%s161 + $0x28] sm:$0xff]
        %v184 = vld [vmem:[%s161 + $0x30] sm:$0xff]
        %v185 = vld [vmem:[%s161 + $0x38] sm:$0xff]
        %v186 = vld [vmem:[%s161 + $0x40] sm:$0xff]
        %v187 = vld [vmem:[%s161 + $0x48] sm:$0xff]
        %v188 = vld [vmem:[%s161 + $0x50] sm:$0xff]
        %v189 = vld [vmem:[%s161 + $0x58] sm:$0xff]
        %v190 = vld [vmem:[%s161 + $0x60] sm:$0xff]
        %v191 = vld [vmem:[%s161 + $0x68] sm:$0xff]
        %v192 = vld [vmem:[%s161 + $0x70] sm:$0xff]
        %v193 = vld [vmem:[%s161 + $0x78] sm:$0xff]
        %v194 = vadd.f32 %v162, %v178
        %v195 = vadd.f32 %v163, %v179
        %v196 = vadd.f32 %v164, %v180
        %v197 = vadd.f32 %v165, %v181
        %v198 = vadd.f32 %v166, %v182
        %v199 = vadd.f32 %v167, %v183
        %v200 = vadd.f32 %v168, %v184
        %v201 = vadd.f32 %v169, %v185
        %v202 = vadd.f32 %v170, %v186
        %v203 = vadd.f32 %v171, %v187
        %v204 = vadd.f32 %v172, %v188
        %v205 = vadd.f32 %v173, %v189
        %v206 = vadd.f32 %v174, %v190
        %v207 = vadd.f32 %v175, %v191
        %v208 = vadd.f32 %v176, %v192
        %v209 = vadd.f32 %v177, %v193
        %v210 = vmax.f32 %v194, 0.0
        %v211 = vmax.f32 %v195, 0.0
        %v212 = vmax.f32 %v196, 0.0
        %v213 = vmax.f32 %v197, 0.0
        %v214 = vmax.f32 %v198, 0.0
        %v215 = vmax.f32 %v199, 0.0
        %v216 = vmax.f32 %v200, 0.0
        %v217 = vmax.f32 %v201, 0.0
        %v218 = vmax.f32 %v202, 0.0
        %v219 = vmax.f32 %v203, 0.0
        %v220 = vmax.f32 %v204, 0.0
        %v221 = vmax.f32 %v205, 0.0
        %v222 = vmax.f32 %v206, 0.0
        %v223 = vmax.f32 %v207, 0.0
        %v224 = vmax.f32 %v208, 0.0
        %v225 = vmax.f32 %v209, 0.0
        %vm226 = vcmask 130048
        %227 = vst.msk [vmem:[%s151] sm:$0xff] %vm226, %v210
        %228 = vst.msk [vmem:[%s151 + $0x8] sm:$0xff] %vm226, %v211
        %229 = vst.msk [vmem:[%s151 + $0x10] sm:$0xff] %vm226, %v212
        %230 = vst.msk [vmem:[%s151 + $0x18] sm:$0xff] %vm226, %v213
        %231 = vst.msk [vmem:[%s151 + $0x20] sm:$0xff] %vm226, %v214
        %232 = vst.msk [vmem:[%s151 + $0x28] sm:$0xff] %vm226, %v215
        %233 = vst.msk [vmem:[%s151 + $0x30] sm:$0xff] %vm226, %v216
        %234 = vst.msk [vmem:[%s151 + $0x38] sm:$0xff] %vm226, %v217
        %235 = vst.msk [vmem:[%s151 + $0x40] sm:$0xff] %vm226, %v218
        %236 = vst.msk [vmem:[%s151 + $0x48] sm:$0xff] %vm226, %v219
        %237 = vst.msk [vmem:[%s151 + $0x50] sm:$0xff] %vm226, %v220
        %238 = vst.msk [vmem:[%s151 + $0x58] sm:$0xff] %vm226, %v221
        %239 = vst.msk [vmem:[%s151 + $0x60] sm:$0xff] %vm226, %v222
        %240 = vst.msk [vmem:[%s151 + $0x68] sm:$0xff] %vm226, %v223
        %241 = vst.msk [vmem:[%s151 + $0x70] sm:$0xff] %vm226, %v224
        %242 = vst.msk [vmem:[%s151 + $0x78] sm:$0xff] %vm226, %v225
        %s243 = sand.u32 %s76, 1
        %s244 = scalar_lea.sflag [#allocation3], %s243
        %s245 = sand.u32 %s76, 1
        %s246 = smul.addr %s245, 128
        %s247 = scalar_lea.vmem [#allocation2], %s246
        // Predicated region
        $region29: #{axial_attn_forward.9} parent=27 // pred_check
          %p248 = pneg %p86
        $region30: #{axial_attn_forward.9} parent=27 // pred_check_branch
          %250 = sbr.rel (%p248) target = $region32
        $region31: #{axial_attn_forward.9} parent=27 // pred_region
          %s252 = ssub.s32 2048, 2048
          %253 = vsyncadd %s244, %s252
          %s254 = smul.addr %s16, 16
          %s255 = smul.addr %s254, 128
          %s256 = scalar_lea.hbm %s2, %s255
          %s257 = sshll.u32 %s247, 4
          %s258 = int_to_ptr.vmem [resolvable:$true] %s257
          %263 = dma.vmem_to_hbm [thread:$0]  %s258, 2048, %s256, %s244, 128, 128, 8
        $region32: #{axial_attn_forward.9} parent=27 // pred_fallthru
          _
      $region28: #{axial_attn_forward.9} parent=5 // pred_fallthru
        _
      %p264 = scmp.le.s32.totalorder 2, %s11
      // Predicated region
      $region33: #{axial_attn_forward.9} parent=5 // pred_check
        %p265 = pneg %p264
      $region34: #{axial_attn_forward.9} parent=5 // pred_check_branch
        %267 = sbr.rel (%p265) target = $region36
      $region35: #{axial_attn_forward.9} parent=5 // pred_region
        %s268 = ssub.s32 %s11, 2
        // Predicated region
        $region37: #{axial_attn_forward.9} parent=35 // pred_check
          %p269 = pneg %p92
        $region38: #{axial_attn_forward.9} parent=35 // pred_check_branch
          %271 = sbr.rel (%p269) target = $region40
        $region39: #{axial_attn_forward.9} parent=35 // pred_region
          %s272 = sand.u32 %s77, 1
          %s273 = scalar_lea.sflag [#allocation3], %s272
          %s274 = sand.u32 %s77, 1
          %s275 = smul.addr %s274, 128
          %s276 = scalar_lea.vmem [#allocation2], %s275
          %277 = dma.done %s273, 2048
        $region40: #{axial_attn_forward.9} parent=35 // pred_fallthru
          _
      $region36: #{axial_attn_forward.9} parent=5 // pred_fallthru
        _
    $region6: #{axial_attn_forward.9} parent=1 // loop_footer
      %s15 = sadd.s32 1, %s11
    $region7: #{axial_attn_forward.9} parent=1 // loop_footer_branch
      %10 = sbr.rel target = $region3
    $region8: #{axial_attn_forward.9} parent=1 // loop_exit
      _
    %278 = vsyncpa [#allocation3], 1
    %s279 = scalar_lea.sflag [#allocation3], 1
    %280 = vsyncpa %s279, 1

</llo_original>
